<compile_context>
chip_gen: v5e
topology: v5e:2x2
jax: 0.10.0
libtpu: 0.0.40
codegen_flags: <defaults>
</compile_context>

<pallas_src>
import functools
import math

import jax
import jax.numpy as jnp
from jax import lax
from jax.experimental import pallas as pl
from jax.experimental.pallas import tpu as pltpu


def _ln_relu(y, g, b):
    # torch.nn.LayerNorm (biased variance, eps=1e-5) followed by ReLU, in f32.
    mean = jnp.mean(y, axis=-1, keepdims=True)
    var = jnp.mean(jnp.square(y - mean), axis=-1, keepdims=True)
    yn = (y - mean) * lax.rsqrt(var + 1e-5)
    return jnp.maximum(yn * g + b, 0.0)


def _point_encoder_kernel(x_ref, w1_ref, w2_ref, wqkv_ref, wo_ref, w3_ref,
                          gb_ref, o_ref, cat_ref, *,
                          model_dim, n_points, feature_dim, out_features):
    M, N, F, Fout = model_dim, n_points, feature_dim, out_features
    TB = x_ref.shape[0]          # batch elements handled by this grid step
    R = TB * N                   # flattened row count for row-wise matmuls
    bf16 = jnp.bfloat16

    # Packed LayerNorm gammas/betas: rows [g1, b1, g2, b2, g3, b3, 0, 0].
    gb = gb_ref[...]
    g1, b1 = gb[0, :F], gb[1, :F]
    g2, b2 = gb[2, :F], gb[3, :F]
    g3, b3 = gb[4, :Fout], gb[5, :Fout]

    # ---- embedding: FeedForward(in, F) -> FeedForward(F, F) ---------------
    x = x_ref[...].reshape(R, x_ref.shape[2]).astype(bf16)             # (R, Fin)
    h = _ln_relu(jnp.dot(x, w1_ref[...],
                         preferred_element_type=jnp.float32), g1, b1)  # (R, F)
    h = _ln_relu(jnp.dot(h.astype(bf16), w2_ref[...],
                         preferred_element_type=jnp.float32), g2, b2)  # (R, F)

    wqkv = wqkv_ref[...]                                               # (F, 2M+F) bf16
    wo = wo_ref[...]                                                   # (F, F)    bf16

    # ---- four applications of the *same* attention module -----------------
    for i in range(4):
        # One fused QKV projection; 1/sqrt(model_dim) already folded into W_Q.
        qkv = jnp.dot(h.astype(bf16), wqkv,
                      preferred_element_type=jnp.float32)              # (R, 2M+F)
        q = qkv[:, :M].reshape(TB, N, M).astype(bf16)
        k = qkv[:, M:2 * M].reshape(TB, N, M).astype(bf16)
        v = qkv[:, 2 * M:].reshape(TB, N, F).astype(bf16)

        # Per-batch scores (TB, Nq, Nk); torch nn.Softmax(dim=1) on (B, N, N)
        # normalizes over the QUERY axis -> axis=1 here.
        # TODO(synk): if N grows large (N^2 scores vs v7x's 64 MiB VMEM),
        # tile the scores over the key axis (columns are independent under the
        # dim=1 softmax, so no online-softmax machinery is needed).
        s = lax.dot_general(q, k, (((2,), (2,)), ((0,), (0,))),
                            preferred_element_type=jnp.float32)        # (TB, N, N)
        s_max = jnp.max(s, axis=1, keepdims=True)
        e = jnp.exp(s - s_max)
        a = e * pl.reciprocal(jnp.sum(e, axis=1, keepdims=True), approx=True)

        att = lax.dot_general(a.astype(bf16), v, (((2,), (1,)), ((0,), (0,))),
                              preferred_element_type=jnp.float32)      # (TB, N, F)
        h = jnp.dot(att.reshape(R, F).astype(bf16), wo,
                    preferred_element_type=jnp.float32)                # (R, F)

        # Write-through to VMEM scratch (replaces trailing concatenate and
        # bounds vreg live ranges); torch.cat(..., dim=1) layout.
        cat_ref[:, i * N:(i + 1) * N, :] = h.reshape(TB, N, F).astype(cat_ref.dtype)

    # ---- final FeedForward(feature_dim, out_features) on the concat slab ---
    cat = cat_ref[...].reshape(4 * R, F)                               # bf16
    y = jnp.dot(cat, w3_ref[...], preferred_element_type=jnp.float32)  # (4R, Fout)
    o_ref[...] = _ln_relu(y, g3, b3).reshape(TB, 4 * N, Fout).astype(o_ref.dtype)


def point_encoder(x, p, *, block_b=None):
    """x: (B, N, in_features) -> (B, 4N, out_features), fully fused."""
    B, N, Fin = x.shape
    F = p["ff1_w"].shape[1]
    M = F // 4
    Fout = p["ff3_w"].shape[1]
    Fmax = p["gb"].shape[1]

    # TB batch elements per grid step so row-wise matmuls see ~128-256 rows.
    # (At B=2 this yields one fat step; for realistic B the grid has >= 2
    #  "parallel" steps so both v7x TensorCores get work.)
    if block_b is None:
        block_b = max(1, min(B, 256 // max(N, 1)))
    TB = block_b
    steps = -(-B // TB)
    Bp = steps * TB
    xp = x if Bp == B else jnp.pad(x, ((0, Bp - B), (0, 0), (0, 0)))

    kernel = functools.partial(_point_encoder_kernel, model_dim=M, n_points=N,
                               feature_dim=F, out_features=Fout)
    rep = lambda b: (0, 0)     # weights: same (only) block every grid step

    # Explicit scoped-VMEM budget (weights*2 + double-buffered I/O blocks +
    # scratch + live activations), with headroom; capped at 64 MiB (v7x).
    w_bytes = (Fin * F + F * F + F * (2 * M + F) + F * F + F * Fout) * 2 + 8 * Fmax * 4
    io_bytes = (TB * N * Fin * 4 + TB * 4 * N * Fout * 4) * 2
    scr_bytes = TB * 4 * N * F * 2
    act_bytes = TB * N * (2 * M + 6 * F) * 4 + 2 * TB * N * N * 4
    vmem_limit = int(min(64 << 20,
                         max(4 << 20, 4 * (2 * w_bytes + io_bytes + scr_bytes + act_bytes))))

    flops = 2 * B * (N * Fin * F + N * F * F
                     + 4 * (N * F * (2 * M + F) + N * N * M + N * N * F + N * F * F)
                     + 4 * N * F * Fout)
    cost = pl.CostEstimate(
        flops=int(flops),
        transcendentals=int(B * (4 * N * N + 10 * N)),
        bytes_accessed=int(x.size * 4 + B * 4 * N * Fout * 4 + w_bytes))

    out = pl.pallas_call(
        kernel,
        out_shape=jax.ShapeDtypeStruct((Bp, 4 * N, Fout), jnp.float32),
        grid_spec=pltpu.PrefetchScalarGridSpec(
            num_scalar_prefetch=0,
            grid=(steps,),
            in_specs=[
                pl.BlockSpec((TB, N, Fin), lambda b: (b, 0, 0)),   # x (TB batches)
                pl.BlockSpec((Fin, F), rep),                       # ff1 W (bf16)
                pl.BlockSpec((F, F), rep),                         # ff2 W
                pl.BlockSpec((F, 2 * M + F), rep),                 # fused Wq|Wk|Wv
                pl.BlockSpec((F, F), rep),                         # Wo
                pl.BlockSpec((F, Fout), rep),                      # ff3 W
                pl.BlockSpec((8, Fmax), rep),                      # packed gamma/beta
            ],
            out_specs=pl.BlockSpec((TB, 4 * N, Fout), lambda b: (b, 0, 0)),
            scratch_shapes=[pltpu.VMEM((TB, 4 * N, F), jnp.bfloat16)],
        ),
        compiler_params=pltpu.CompilerParams(
            dimension_semantics=("parallel",),
            vmem_limit_bytes=vmem_limit),
        cost_estimate=cost,
    )(xp, p["ff1_w"], p["ff2_w"], p["wqkv"], p["wo"], p["ff3_w"], p["gb"])

    return out if Bp == B else out[:B]


# ----------------------------------------------------------------------------
# Parameter init (deterministic): kaiming_normal_ == N(0, sqrt(2/fan_in)) for
# a torch weight of shape (out, in); stored transposed (in, out), in bf16 for
# the MXU. bias=False everywhere (PointEncoder defaults). LayerNorm gamma=1,
# beta=0, packed into one (8, max(F, Fout)) f32 array.
# ----------------------------------------------------------------------------
def kaiming_t(key, fan_in, fan_out):
    std = math.sqrt(2.0 / fan_in)
    w = jax.random.normal(key, (fan_out, fan_in), dtype=jnp.float32) * std
    return w.T


def init_params(key, in_features, feature_dim, out_features):
    F, Fout = feature_dim, out_features
    M = F // 4
    Fmax = max(F, Fout)
    keys = jax.random.split(key, 7)

    wq = kaiming_t(keys[2], F, M) / math.sqrt(M)   # 1/sqrt(model_dim) folded in
    wk = kaiming_t(keys[3], F, M)
    wv = kaiming_t(keys[4], F, F)
    # TODO(synk): for F >= 128, pad the Q/K/V column starts of wqkv to
    # 128-lane-aligned offsets (or split the projection) to avoid masked lane
    # slices; negligible at F=32.
    wqkv = jnp.concatenate([wq, wk, wv], axis=1)   # (F, 2M+F)

    def pad_row(v):
        return jnp.pad(v, (0, Fmax - v.shape[0]))

    gb = jnp.stack([
        pad_row(jnp.ones((F,), jnp.float32)),      # ff1 gamma
        pad_row(jnp.zeros((F,), jnp.float32)),     # ff1 beta
        pad_row(jnp.ones((F,), jnp.float32)),      # ff2 gamma
        pad_row(jnp.zeros((F,), jnp.float32)),     # ff2 beta
        pad_row(jnp.ones((Fout,), jnp.float32)),   # ff3 gamma
        pad_row(jnp.zeros((Fout,), jnp.float32)),  # ff3 beta
        jnp.zeros((Fmax,), jnp.float32),
        jnp.zeros((Fmax,), jnp.float32),
    ], axis=0)

    bf16 = jnp.bfloat16
    return {
        "ff1_w": kaiming_t(keys[0], in_features, F).astype(bf16),
        "ff2_w": kaiming_t(keys[1], F, F).astype(bf16),
        "wqkv": wqkv.astype(bf16),
        "wo": kaiming_t(keys[5], F, F).astype(bf16),
        # TODO(synk): the torch module constructs the final FeedForward with
        # fresh random weights inside forward(); here it is initialized once,
        # deterministically (semantic difference in randomness only).
        "ff3_w": kaiming_t(keys[6], F, Fout).astype(bf16),
        "gb": gb,
    }


if __name__ == "__main__":
    B, N = 2, 8                    # batch, number of points
    in_features, feature_dim, out_features = 16, 32, 32

    key = jax.random.PRNGKey(0)
    kx, kp = jax.random.split(key)
    x = jax.random.normal(kx, (B, N, in_features), dtype=jnp.float32)
    params = init_params(kp, in_features, feature_dim, out_features)

    out = jax.jit(point_encoder)(x, params)
    out = jax.block_until_ready(out)
    assert out.shape == (B, 4 * N, out_features), out.shape
    assert bool(jnp.all(jnp.isfinite(out)))
    print("KERNEL_OK")
</pallas_src>

<mosaic_0001>
module attributes {stable_mosaic.version = 11 : i64} {
  func.func @_point_encoder_kernel(%arg0: i32, %arg1: memref<2x8x16xf32, #tpu.memory_space<vmem>>, %arg2: memref<16x32xbf16, #tpu.memory_space<vmem>>, %arg3: memref<32x32xbf16, #tpu.memory_space<vmem>>, %arg4: memref<32x48xbf16, #tpu.memory_space<vmem>>, %arg5: memref<32x32xbf16, #tpu.memory_space<vmem>>, %arg6: memref<32x32xbf16, #tpu.memory_space<vmem>>, %arg7: memref<8x32xf32, #tpu.memory_space<vmem>>, %arg8: memref<2x32x32xf32, #tpu.memory_space<vmem>>, %arg9: memref<2x32x32xbf16, #tpu.memory_space<vmem>>) attributes {dimension_semantics = [#tpu.dimension_semantics<parallel>], iteration_bounds = array<i64: 1>, scalar_prefetch = 0 : i64, scratch_operands = 1 : i64, tpu.core_type = #tpu.core_type<tc>, window_params = [{transform_indices = @transform_0, window_bounds = array<i64: 2, 8, 16>}, {pipeline_mode = #tpu.pipeline_mode<synchronous>, transform_indices = @transform_1, window_bounds = array<i64: 16, 32>}, {pipeline_mode = #tpu.pipeline_mode<synchronous>, transform_indices = @transform_2, window_bounds = array<i64: 32, 32>}, {pipeline_mode = #tpu.pipeline_mode<synchronous>, transform_indices = @transform_3, window_bounds = array<i64: 32, 48>}, {pipeline_mode = #tpu.pipeline_mode<synchronous>, transform_indices = @transform_4, window_bounds = array<i64: 32, 32>}, {pipeline_mode = #tpu.pipeline_mode<synchronous>, transform_indices = @transform_5, window_bounds = array<i64: 32, 32>}, {pipeline_mode = #tpu.pipeline_mode<synchronous>, transform_indices = @transform_6, window_bounds = array<i64: 8, 32>}, {transform_indices = @transform_7, window_bounds = array<i64: 2, 32, 32>}]} {
    %c0 = arith.constant 0 : index
    %c0_0 = arith.constant 0 : index
    %0 = vector.load %arg7[%c0, %c0_0] : memref<8x32xf32, #tpu.memory_space<vmem>>, vector<8x32xf32>
    %1 = vector.extract_strided_slice %0 {offsets = [0, 0], sizes = [1, 32], strides = [1, 1]} : vector<8x32xf32> to vector<1x32xf32>
    %2 = vector.shape_cast %1 : vector<1x32xf32> to vector<32xf32>
    %3 = vector.extract_strided_slice %0 {offsets = [1, 0], sizes = [1, 32], strides = [1, 1]} : vector<8x32xf32> to vector<1x32xf32>
    %4 = vector.shape_cast %3 : vector<1x32xf32> to vector<32xf32>
    %5 = vector.extract_strided_slice %0 {offsets = [2, 0], sizes = [1, 32], strides = [1, 1]} : vector<8x32xf32> to vector<1x32xf32>
    %6 = vector.shape_cast %5 : vector<1x32xf32> to vector<32xf32>
    %7 = vector.extract_strided_slice %0 {offsets = [3, 0], sizes = [1, 32], strides = [1, 1]} : vector<8x32xf32> to vector<1x32xf32>
    %8 = vector.shape_cast %7 : vector<1x32xf32> to vector<32xf32>
    %9 = vector.extract_strided_slice %0 {offsets = [4, 0], sizes = [1, 32], strides = [1, 1]} : vector<8x32xf32> to vector<1x32xf32>
    %10 = vector.shape_cast %9 : vector<1x32xf32> to vector<32xf32>
    %11 = vector.extract_strided_slice %0 {offsets = [5, 0], sizes = [1, 32], strides = [1, 1]} : vector<8x32xf32> to vector<1x32xf32>
    %12 = vector.shape_cast %11 : vector<1x32xf32> to vector<32xf32>
    %c0_1 = arith.constant 0 : index
    %c0_2 = arith.constant 0 : index
    %c0_3 = arith.constant 0 : index
    %13 = vector.load %arg1[%c0_1, %c0_2, %c0_3] : memref<2x8x16xf32, #tpu.memory_space<vmem>>, vector<2x8x16xf32>
    %14 = vector.shape_cast %13 : vector<2x8x16xf32> to vector<16x16xf32>
    %15 = arith.truncf %14 : vector<16x16xf32> to vector<16x16xbf16>
    %c0_4 = arith.constant 0 : index
    %c0_5 = arith.constant 0 : index
    %16 = vector.load %arg2[%c0_4, %c0_5] : memref<16x32xbf16, #tpu.memory_space<vmem>>, vector<16x32xbf16>
    %cst = arith.constant dense<0.000000e+00> : vector<16x32xf32>
    %17 = tpu.matmul %15, %16, %cst {dimension_numbers = #tpu.dot_dimension_numbers<[1], [0], [0], [1], [0, 0, 1, 1], [], []>} : vector<16x16xbf16>, vector<16x32xbf16>, vector<16x32xf32> -> vector<16x32xf32>
    %cst_6 = arith.constant dense<0.000000e+00> : vector<16xf32>
    %18 = vector.multi_reduction <add>, %17, %cst_6 [1] : vector<16x32xf32> to vector<16xf32>
    %19 = vector.shape_cast %18 : vector<16xf32> to vector<16x1xf32>
    %cst_7 = arith.constant 3.200000e+01 : f32
    %20 = vector.broadcast %cst_7 : f32 to vector<16x1xf32>
    %21 = arith.divf %19, %20 : vector<16x1xf32>
    %22 = vector.broadcast %21 : vector<16x1xf32> to vector<16x32xf32>
    %23 = arith.subf %17, %22 : vector<16x32xf32>
    %24 = arith.mulf %23, %23 : vector<16x32xf32>
    %cst_8 = arith.constant dense<0.000000e+00> : vector<16xf32>
    %25 = vector.multi_reduction <add>, %24, %cst_8 [1] : vector<16x32xf32> to vector<16xf32>
    %26 = vector.shape_cast %25 : vector<16xf32> to vector<16x1xf32>
    %cst_9 = arith.constant 3.200000e+01 : f32
    %27 = vector.broadcast %cst_9 : f32 to vector<16x1xf32>
    %28 = arith.divf %26, %27 : vector<16x1xf32>
    %29 = vector.broadcast %21 : vector<16x1xf32> to vector<16x32xf32>
    %30 = arith.subf %17, %29 : vector<16x32xf32>
    %cst_10 = arith.constant 9.99999974E-6 : f32
    %31 = vector.broadcast %cst_10 : f32 to vector<16x1xf32>
    %32 = arith.addf %28, %31 : vector<16x1xf32>
    %33 = math.rsqrt %32 : vector<16x1xf32>
    %34 = vector.broadcast %33 : vector<16x1xf32> to vector<16x32xf32>
    %35 = arith.mulf %30, %34 : vector<16x32xf32>
    %36 = vector.shape_cast %2 : vector<32xf32> to vector<1x32xf32>
    %37 = vector.broadcast %36 : vector<1x32xf32> to vector<16x32xf32>
    %38 = arith.mulf %35, %37 : vector<16x32xf32>
    %39 = vector.shape_cast %4 : vector<32xf32> to vector<1x32xf32>
    %40 = vector.broadcast %39 : vector<1x32xf32> to vector<16x32xf32>
    %41 = arith.addf %38, %40 : vector<16x32xf32>
    %cst_11 = arith.constant 0.000000e+00 : f32
    %42 = vector.broadcast %cst_11 : f32 to vector<16x32xf32>
    %43 = arith.maximumf %41, %42 : vector<16x32xf32>
    %44 = arith.truncf %43 : vector<16x32xf32> to vector<16x32xbf16>
    %c0_12 = arith.constant 0 : index
    %c0_13 = arith.constant 0 : index
    %45 = vector.load %arg3[%c0_12, %c0_13] : memref<32x32xbf16, #tpu.memory_space<vmem>>, vector<32x32xbf16>
    %cst_14 = arith.constant dense<0.000000e+00> : vector<16x32xf32>
    %46 = tpu.matmul %44, %45, %cst_14 {dimension_numbers = #tpu.dot_dimension_numbers<[1], [0], [0], [1], [0, 0, 1, 1], [], []>} : vector<16x32xbf16>, vector<32x32xbf16>, vector<16x32xf32> -> vector<16x32xf32>
    %cst_15 = arith.constant dense<0.000000e+00> : vector<16xf32>
    %47 = vector.multi_reduction <add>, %46, %cst_15 [1] : vector<16x32xf32> to vector<16xf32>
    %48 = vector.shape_cast %47 : vector<16xf32> to vector<16x1xf32>
    %cst_16 = arith.constant 3.200000e+01 : f32
    %49 = vector.broadcast %cst_16 : f32 to vector<16x1xf32>
    %50 = arith.divf %48, %49 : vector<16x1xf32>
    %51 = vector.broadcast %50 : vector<16x1xf32> to vector<16x32xf32>
    %52 = arith.subf %46, %51 : vector<16x32xf32>
    %53 = arith.mulf %52, %52 : vector<16x32xf32>
    %cst_17 = arith.constant dense<0.000000e+00> : vector<16xf32>
    %54 = vector.multi_reduction <add>, %53, %cst_17 [1] : vector<16x32xf32> to vector<16xf32>
    %55 = vector.shape_cast %54 : vector<16xf32> to vector<16x1xf32>
    %cst_18 = arith.constant 3.200000e+01 : f32
    %56 = vector.broadcast %cst_18 : f32 to vector<16x1xf32>
    %57 = arith.divf %55, %56 : vector<16x1xf32>
    %58 = vector.broadcast %50 : vector<16x1xf32> to vector<16x32xf32>
    %59 = arith.subf %46, %58 : vector<16x32xf32>
    %cst_19 = arith.constant 9.99999974E-6 : f32
    %60 = vector.broadcast %cst_19 : f32 to vector<16x1xf32>
    %61 = arith.addf %57, %60 : vector<16x1xf32>
    %62 = math.rsqrt %61 : vector<16x1xf32>
    %63 = vector.broadcast %62 : vector<16x1xf32> to vector<16x32xf32>
    %64 = arith.mulf %59, %63 : vector<16x32xf32>
    %65 = vector.shape_cast %6 : vector<32xf32> to vector<1x32xf32>
    %66 = vector.broadcast %65 : vector<1x32xf32> to vector<16x32xf32>
    %67 = arith.mulf %64, %66 : vector<16x32xf32>
    %68 = vector.shape_cast %8 : vector<32xf32> to vector<1x32xf32>
    %69 = vector.broadcast %68 : vector<1x32xf32> to vector<16x32xf32>
    %70 = arith.addf %67, %69 : vector<16x32xf32>
    %cst_20 = arith.constant 0.000000e+00 : f32
    %71 = vector.broadcast %cst_20 : f32 to vector<16x32xf32>
    %72 = arith.maximumf %70, %71 : vector<16x32xf32>
    %c0_21 = arith.constant 0 : index
    %c0_22 = arith.constant 0 : index
    %73 = vector.load %arg4[%c0_21, %c0_22] : memref<32x48xbf16, #tpu.memory_space<vmem>>, vector<32x48xbf16>
    %c0_23 = arith.constant 0 : index
    %c0_24 = arith.constant 0 : index
    %74 = vector.load %arg5[%c0_23, %c0_24] : memref<32x32xbf16, #tpu.memory_space<vmem>>, vector<32x32xbf16>
    %75 = arith.truncf %72 : vector<16x32xf32> to vector<16x32xbf16>
    %cst_25 = arith.constant dense<0.000000e+00> : vector<16x48xf32>
    %76 = tpu.matmul %75, %73, %cst_25 {dimension_numbers = #tpu.dot_dimension_numbers<[1], [0], [0], [1], [0, 0, 1, 1], [], []>} : vector<16x32xbf16>, vector<32x48xbf16>, vector<16x48xf32> -> vector<16x48xf32>
    %77 = vector.extract_strided_slice %76 {offsets = [0, 0], sizes = [16, 8], strides = [1, 1]} : vector<16x48xf32> to vector<16x8xf32>
    %78 = vector.shape_cast %77 : vector<16x8xf32> to vector<2x8x8xf32>
    %79 = arith.truncf %78 : vector<2x8x8xf32> to vector<2x8x8xbf16>
    %80 = vector.extract_strided_slice %76 {offsets = [0, 8], sizes = [16, 8], strides = [1, 1]} : vector<16x48xf32> to vector<16x8xf32>
    %81 = vector.shape_cast %80 : vector<16x8xf32> to vector<2x8x8xf32>
    %82 = arith.truncf %81 : vector<2x8x8xf32> to vector<2x8x8xbf16>
    %83 = vector.extract_strided_slice %76 {offsets = [0, 16], sizes = [16, 32], strides = [1, 1]} : vector<16x48xf32> to vector<16x32xf32>
    %84 = vector.shape_cast %83 : vector<16x32xf32> to vector<2x8x32xf32>
    %85 = arith.truncf %84 : vector<2x8x32xf32> to vector<2x8x32xbf16>
    %cst_26 = arith.constant dense<0.000000e+00> : vector<2x8x8xf32>
    %86 = tpu.matmul %79, %82, %cst_26 {dimension_numbers = #tpu.dot_dimension_numbers<[2], [2], [1], [1], [0, 0, 0, 1, 1, 1], [0], [0]>} : vector<2x8x8xbf16>, vector<2x8x8xbf16>, vector<2x8x8xf32> -> vector<2x8x8xf32>
    %cst_27 = arith.constant dense<0xFF800000> : vector<2x8xf32>
    %87 = vector.multi_reduction <maximumf>, %86, %cst_27 [1] : vector<2x8x8xf32> to vector<2x8xf32>
    %88 = vector.shape_cast %87 : vector<2x8xf32> to vector<2x1x8xf32>
    %89 = vector.broadcast %88 : vector<2x1x8xf32> to vector<2x8x8xf32>
    %90 = arith.subf %86, %89 : vector<2x8x8xf32>
    %91 = math.exp %90 : vector<2x8x8xf32>
    %cst_28 = arith.constant dense<0.000000e+00> : vector<2x8xf32>
    %92 = vector.multi_reduction <add>, %91, %cst_28 [1] : vector<2x8x8xf32> to vector<2x8xf32>
    %93 = vector.shape_cast %92 : vector<2x8xf32> to vector<2x1x8xf32>
    %94 = tpu.reciprocal %93 {approx = true} : vector<2x1x8xf32> -> vector<2x1x8xf32>
    %95 = vector.broadcast %94 : vector<2x1x8xf32> to vector<2x8x8xf32>
    %96 = arith.mulf %91, %95 : vector<2x8x8xf32>
    %97 = arith.truncf %96 : vector<2x8x8xf32> to vector<2x8x8xbf16>
    %cst_29 = arith.constant dense<0.000000e+00> : vector<2x8x32xf32>
    %98 = tpu.matmul %97, %85, %cst_29 {dimension_numbers = #tpu.dot_dimension_numbers<[2], [1], [1], [2], [0, 0, 0, 1, 1, 2], [0], [0]>} : vector<2x8x8xbf16>, vector<2x8x32xbf16>, vector<2x8x32xf32> -> vector<2x8x32xf32>
    %99 = vector.shape_cast %98 : vector<2x8x32xf32> to vector<16x32xf32>
    %100 = arith.truncf %99 : vector<16x32xf32> to vector<16x32xbf16>
    %cst_30 = arith.constant dense<0.000000e+00> : vector<16x32xf32>
    %101 = tpu.matmul %100, %74, %cst_30 {dimension_numbers = #tpu.dot_dimension_numbers<[1], [0], [0], [1], [0, 0, 1, 1], [], []>} : vector<16x32xbf16>, vector<32x32xbf16>, vector<16x32xf32> -> vector<16x32xf32>
    %102 = vector.shape_cast %101 : vector<16x32xf32> to vector<2x8x32xf32>
    %103 = arith.truncf %102 : vector<2x8x32xf32> to vector<2x8x32xbf16>
    %c0_31 = arith.constant 0 : index
    %c0_32 = arith.constant 0 : index
    %c0_33 = arith.constant 0 : index
    %104 = vector.load %arg9[%c0_31, %c0_32, %c0_33] : memref<2x32x32xbf16, #tpu.memory_space<vmem>>, vector<2x8x32xbf16>
    tpu.vector_store %arg9[%c0_31, %c0_32, %c0_33], %103 {strides = array<i32>} : memref<2x32x32xbf16, #tpu.memory_space<vmem>>, vector<2x8x32xbf16>,
    %105 = arith.truncf %101 : vector<16x32xf32> to vector<16x32xbf16>
    %cst_34 = arith.constant dense<0.000000e+00> : vector<16x48xf32>
    %106 = tpu.matmul %105, %73, %cst_34 {dimension_numbers = #tpu.dot_dimension_numbers<[1], [0], [0], [1], [0, 0, 1, 1], [], []>} : vector<16x32xbf16>, vector<32x48xbf16>, vector<16x48xf32> -> vector<16x48xf32>
    %107 = vector.extract_strided_slice %106 {offsets = [0, 0], sizes = [16, 8], strides = [1, 1]} : vector<16x48xf32> to vector<16x8xf32>
    %108 = vector.shape_cast %107 : vector<16x8xf32> to vector<2x8x8xf32>
    %109 = arith.truncf %108 : vector<2x8x8xf32> to vector<2x8x8xbf16>
    %110 = vector.extract_strided_slice %106 {offsets = [0, 8], sizes = [16, 8], strides = [1, 1]} : vector<16x48xf32> to vector<16x8xf32>
    %111 = vector.shape_cast %110 : vector<16x8xf32> to vector<2x8x8xf32>
    %112 = arith.truncf %111 : vector<2x8x8xf32> to vector<2x8x8xbf16>
    %113 = vector.extract_strided_slice %106 {offsets = [0, 16], sizes = [16, 32], strides = [1, 1]} : vector<16x48xf32> to vector<16x32xf32>
    %114 = vector.shape_cast %113 : vector<16x32xf32> to vector<2x8x32xf32>
    %115 = arith.truncf %114 : vector<2x8x32xf32> to vector<2x8x32xbf16>
    %cst_35 = arith.constant dense<0.000000e+00> : vector<2x8x8xf32>
    %116 = tpu.matmul %109, %112, %cst_35 {dimension_numbers = #tpu.dot_dimension_numbers<[2], [2], [1], [1], [0, 0, 0, 1, 1, 1], [0], [0]>} : vector<2x8x8xbf16>, vector<2x8x8xbf16>, vector<2x8x8xf32> -> vector<2x8x8xf32>
    %cst_36 = arith.constant dense<0xFF800000> : vector<2x8xf32>
    %117 = vector.multi_reduction <maximumf>, %116, %cst_36 [1] : vector<2x8x8xf32> to vector<2x8xf32>
    %118 = vector.shape_cast %117 : vector<2x8xf32> to vector<2x1x8xf32>
    %119 = vector.broadcast %118 : vector<2x1x8xf32> to vector<2x8x8xf32>
    %120 = arith.subf %116, %119 : vector<2x8x8xf32>
    %121 = math.exp %120 : vector<2x8x8xf32>
    %cst_37 = arith.constant dense<0.000000e+00> : vector<2x8xf32>
    %122 = vector.multi_reduction <add>, %121, %cst_37 [1] : vector<2x8x8xf32> to vector<2x8xf32>
    %123 = vector.shape_cast %122 : vector<2x8xf32> to vector<2x1x8xf32>
    %124 = tpu.reciprocal %123 {approx = true} : vector<2x1x8xf32> -> vector<2x1x8xf32>
    %125 = vector.broadcast %124 : vector<2x1x8xf32> to vector<2x8x8xf32>
    %126 = arith.mulf %121, %125 : vector<2x8x8xf32>
    %127 = arith.truncf %126 : vector<2x8x8xf32> to vector<2x8x8xbf16>
    %cst_38 = arith.constant dense<0.000000e+00> : vector<2x8x32xf32>
    %128 = tpu.matmul %127, %115, %cst_38 {dimension_numbers = #tpu.dot_dimension_numbers<[2], [1], [1], [2], [0, 0, 0, 1, 1, 2], [0], [0]>} : vector<2x8x8xbf16>, vector<2x8x32xbf16>, vector<2x8x32xf32> -> vector<2x8x32xf32>
    %129 = vector.shape_cast %128 : vector<2x8x32xf32> to vector<16x32xf32>
    %130 = arith.truncf %129 : vector<16x32xf32> to vector<16x32xbf16>
    %cst_39 = arith.constant dense<0.000000e+00> : vector<16x32xf32>
    %131 = tpu.matmul %130, %74, %cst_39 {dimension_numbers = #tpu.dot_dimension_numbers<[1], [0], [0], [1], [0, 0, 1, 1], [], []>} : vector<16x32xbf16>, vector<32x32xbf16>, vector<16x32xf32> -> vector<16x32xf32>
    %132 = vector.shape_cast %131 : vector<16x32xf32> to vector<2x8x32xf32>
    %133 = arith.truncf %132 : vector<2x8x32xf32> to vector<2x8x32xbf16>
    %c0_40 = arith.constant 0 : index
    %c8 = arith.constant 8 : index
    %c0_41 = arith.constant 0 : index
    %134 = vector.load %arg9[%c0_40, %c8, %c0_41] : memref<2x32x32xbf16, #tpu.memory_space<vmem>>, vector<2x8x32xbf16>
    tpu.vector_store %arg9[%c0_40, %c8, %c0_41], %133 {strides = array<i32>} : memref<2x32x32xbf16, #tpu.memory_space<vmem>>, vector<2x8x32xbf16>,
    %135 = arith.truncf %131 : vector<16x32xf32> to vector<16x32xbf16>
    %cst_42 = arith.constant dense<0.000000e+00> : vector<16x48xf32>
    %136 = tpu.matmul %135, %73, %cst_42 {dimension_numbers = #tpu.dot_dimension_numbers<[1], [0], [0], [1], [0, 0, 1, 1], [], []>} : vector<16x32xbf16>, vector<32x48xbf16>, vector<16x48xf32> -> vector<16x48xf32>
    %137 = vector.extract_strided_slice %136 {offsets = [0, 0], sizes = [16, 8], strides = [1, 1]} : vector<16x48xf32> to vector<16x8xf32>
    %138 = vector.shape_cast %137 : vector<16x8xf32> to vector<2x8x8xf32>
    %139 = arith.truncf %138 : vector<2x8x8xf32> to vector<2x8x8xbf16>
    %140 = vector.extract_strided_slice %136 {offsets = [0, 8], sizes = [16, 8], strides = [1, 1]} : vector<16x48xf32> to vector<16x8xf32>
    %141 = vector.shape_cast %140 : vector<16x8xf32> to vector<2x8x8xf32>
    %142 = arith.truncf %141 : vector<2x8x8xf32> to vector<2x8x8xbf16>
    %143 = vector.extract_strided_slice %136 {offsets = [0, 16], sizes = [16, 32], strides = [1, 1]} : vector<16x48xf32> to vector<16x32xf32>
    %144 = vector.shape_cast %143 : vector<16x32xf32> to vector<2x8x32xf32>
    %145 = arith.truncf %144 : vector<2x8x32xf32> to vector<2x8x32xbf16>
    %cst_43 = arith.constant dense<0.000000e+00> : vector<2x8x8xf32>
    %146 = tpu.matmul %139, %142, %cst_43 {dimension_numbers = #tpu.dot_dimension_numbers<[2], [2], [1], [1], [0, 0, 0, 1, 1, 1], [0], [0]>} : vector<2x8x8xbf16>, vector<2x8x8xbf16>, vector<2x8x8xf32> -> vector<2x8x8xf32>
    %cst_44 = arith.constant dense<0xFF800000> : vector<2x8xf32>
    %147 = vector.multi_reduction <maximumf>, %146, %cst_44 [1] : vector<2x8x8xf32> to vector<2x8xf32>
    %148 = vector.shape_cast %147 : vector<2x8xf32> to vector<2x1x8xf32>
    %149 = vector.broadcast %148 : vector<2x1x8xf32> to vector<2x8x8xf32>
    %150 = arith.subf %146, %149 : vector<2x8x8xf32>
    %151 = math.exp %150 : vector<2x8x8xf32>
    %cst_45 = arith.constant dense<0.000000e+00> : vector<2x8xf32>
    %152 = vector.multi_reduction <add>, %151, %cst_45 [1] : vector<2x8x8xf32> to vector<2x8xf32>
    %153 = vector.shape_cast %152 : vector<2x8xf32> to vector<2x1x8xf32>
    %154 = tpu.reciprocal %153 {approx = true} : vector<2x1x8xf32> -> vector<2x1x8xf32>
    %155 = vector.broadcast %154 : vector<2x1x8xf32> to vector<2x8x8xf32>
    %156 = arith.mulf %151, %155 : vector<2x8x8xf32>
    %157 = arith.truncf %156 : vector<2x8x8xf32> to vector<2x8x8xbf16>
    %cst_46 = arith.constant dense<0.000000e+00> : vector<2x8x32xf32>
    %158 = tpu.matmul %157, %145, %cst_46 {dimension_numbers = #tpu.dot_dimension_numbers<[2], [1], [1], [2], [0, 0, 0, 1, 1, 2], [0], [0]>} : vector<2x8x8xbf16>, vector<2x8x32xbf16>, vector<2x8x32xf32> -> vector<2x8x32xf32>
    %159 = vector.shape_cast %158 : vector<2x8x32xf32> to vector<16x32xf32>
    %160 = arith.truncf %159 : vector<16x32xf32> to vector<16x32xbf16>
    %cst_47 = arith.constant dense<0.000000e+00> : vector<16x32xf32>
    %161 = tpu.matmul %160, %74, %cst_47 {dimension_numbers = #tpu.dot_dimension_numbers<[1], [0], [0], [1], [0, 0, 1, 1], [], []>} : vector<16x32xbf16>, vector<32x32xbf16>, vector<16x32xf32> -> vector<16x32xf32>
    %162 = vector.shape_cast %161 : vector<16x32xf32> to vector<2x8x32xf32>
    %163 = arith.truncf %162 : vector<2x8x32xf32> to vector<2x8x32xbf16>
    %c0_48 = arith.constant 0 : index
    %c16 = arith.constant 16 : index
    %c0_49 = arith.constant 0 : index
    %164 = vector.load %arg9[%c0_48, %c16, %c0_49] : memref<2x32x32xbf16, #tpu.memory_space<vmem>>, vector<2x8x32xbf16>
    tpu.vector_store %arg9[%c0_48, %c16, %c0_49], %163 {strides = array<i32>} : memref<2x32x32xbf16, #tpu.memory_space<vmem>>, vector<2x8x32xbf16>,
    %165 = arith.truncf %161 : vector<16x32xf32> to vector<16x32xbf16>
    %cst_50 = arith.constant dense<0.000000e+00> : vector<16x48xf32>
    %166 = tpu.matmul %165, %73, %cst_50 {dimension_numbers = #tpu.dot_dimension_numbers<[1], [0], [0], [1], [0, 0, 1, 1], [], []>} : vector<16x32xbf16>, vector<32x48xbf16>, vector<16x48xf32> -> vector<16x48xf32>
    %167 = vector.extract_strided_slice %166 {offsets = [0, 0], sizes = [16, 8], strides = [1, 1]} : vector<16x48xf32> to vector<16x8xf32>
    %168 = vector.shape_cast %167 : vector<16x8xf32> to vector<2x8x8xf32>
    %169 = arith.truncf %168 : vector<2x8x8xf32> to vector<2x8x8xbf16>
    %170 = vector.extract_strided_slice %166 {offsets = [0, 8], sizes = [16, 8], strides = [1, 1]} : vector<16x48xf32> to vector<16x8xf32>
    %171 = vector.shape_cast %170 : vector<16x8xf32> to vector<2x8x8xf32>
    %172 = arith.truncf %171 : vector<2x8x8xf32> to vector<2x8x8xbf16>
    %173 = vector.extract_strided_slice %166 {offsets = [0, 16], sizes = [16, 32], strides = [1, 1]} : vector<16x48xf32> to vector<16x32xf32>
    %174 = vector.shape_cast %173 : vector<16x32xf32> to vector<2x8x32xf32>
    %175 = arith.truncf %174 : vector<2x8x32xf32> to vector<2x8x32xbf16>
    %cst_51 = arith.constant dense<0.000000e+00> : vector<2x8x8xf32>
    %176 = tpu.matmul %169, %172, %cst_51 {dimension_numbers = #tpu.dot_dimension_numbers<[2], [2], [1], [1], [0, 0, 0, 1, 1, 1], [0], [0]>} : vector<2x8x8xbf16>, vector<2x8x8xbf16>, vector<2x8x8xf32> -> vector<2x8x8xf32>
    %cst_52 = arith.constant dense<0xFF800000> : vector<2x8xf32>
    %177 = vector.multi_reduction <maximumf>, %176, %cst_52 [1] : vector<2x8x8xf32> to vector<2x8xf32>
    %178 = vector.shape_cast %177 : vector<2x8xf32> to vector<2x1x8xf32>
    %179 = vector.broadcast %178 : vector<2x1x8xf32> to vector<2x8x8xf32>
    %180 = arith.subf %176, %179 : vector<2x8x8xf32>
    %181 = math.exp %180 : vector<2x8x8xf32>
    %cst_53 = arith.constant dense<0.000000e+00> : vector<2x8xf32>
    %182 = vector.multi_reduction <add>, %181, %cst_53 [1] : vector<2x8x8xf32> to vector<2x8xf32>
    %183 = vector.shape_cast %182 : vector<2x8xf32> to vector<2x1x8xf32>
    %184 = tpu.reciprocal %183 {approx = true} : vector<2x1x8xf32> -> vector<2x1x8xf32>
    %185 = vector.broadcast %184 : vector<2x1x8xf32> to vector<2x8x8xf32>
    %186 = arith.mulf %181, %185 : vector<2x8x8xf32>
    %187 = arith.truncf %186 : vector<2x8x8xf32> to vector<2x8x8xbf16>
    %cst_54 = arith.constant dense<0.000000e+00> : vector<2x8x32xf32>
    %188 = tpu.matmul %187, %175, %cst_54 {dimension_numbers = #tpu.dot_dimension_numbers<[2], [1], [1], [2], [0, 0, 0, 1, 1, 2], [0], [0]>} : vector<2x8x8xbf16>, vector<2x8x32xbf16>, vector<2x8x32xf32> -> vector<2x8x32xf32>
    %189 = vector.shape_cast %188 : vector<2x8x32xf32> to vector<16x32xf32>
    %190 = arith.truncf %189 : vector<16x32xf32> to vector<16x32xbf16>
    %cst_55 = arith.constant dense<0.000000e+00> : vector<16x32xf32>
    %191 = tpu.matmul %190, %74, %cst_55 {dimension_numbers = #tpu.dot_dimension_numbers<[1], [0], [0], [1], [0, 0, 1, 1], [], []>} : vector<16x32xbf16>, vector<32x32xbf16>, vector<16x32xf32> -> vector<16x32xf32>
    %192 = vector.shape_cast %191 : vector<16x32xf32> to vector<2x8x32xf32>
    %193 = arith.truncf %192 : vector<2x8x32xf32> to vector<2x8x32xbf16>
    %c0_56 = arith.constant 0 : index
    %c24 = arith.constant 24 : index
    %c0_57 = arith.constant 0 : index
    %194 = vector.load %arg9[%c0_56, %c24, %c0_57] : memref<2x32x32xbf16, #tpu.memory_space<vmem>>, vector<2x8x32xbf16>
    tpu.vector_store %arg9[%c0_56, %c24, %c0_57], %193 {strides = array<i32>} : memref<2x32x32xbf16, #tpu.memory_space<vmem>>, vector<2x8x32xbf16>,
    %c0_58 = arith.constant 0 : index
    %c0_59 = arith.constant 0 : index
    %c0_60 = arith.constant 0 : index
    %195 = vector.load %arg9[%c0_58, %c0_59, %c0_60] : memref<2x32x32xbf16, #tpu.memory_space<vmem>>, vector<2x32x32xbf16>
    %196 = vector.shape_cast %195 : vector<2x32x32xbf16> to vector<64x32xbf16>
    %c0_61 = arith.constant 0 : index
    %c0_62 = arith.constant 0 : index
    %197 = vector.load %arg6[%c0_61, %c0_62] : memref<32x32xbf16, #tpu.memory_space<vmem>>, vector<32x32xbf16>
    %cst_63 = arith.constant dense<0.000000e+00> : vector<64x32xf32>
    %198 = tpu.matmul %196, %197, %cst_63 {dimension_numbers = #tpu.dot_dimension_numbers<[1], [0], [0], [1], [0, 0, 1, 1], [], []>} : vector<64x32xbf16>, vector<32x32xbf16>, vector<64x32xf32> -> vector<64x32xf32>
    %cst_64 = arith.constant dense<0.000000e+00> : vector<64xf32>
    %199 = vector.multi_reduction <add>, %198, %cst_64 [1] : vector<64x32xf32> to vector<64xf32>
    %200 = vector.shape_cast %199 : vector<64xf32> to vector<64x1xf32>
    %cst_65 = arith.constant 3.200000e+01 : f32
    %201 = vector.broadcast %cst_65 : f32 to vector<64x1xf32>
    %202 = arith.divf %200, %201 : vector<64x1xf32>
    %203 = vector.broadcast %202 : vector<64x1xf32> to vector<64x32xf32>
    %204 = arith.subf %198, %203 : vector<64x32xf32>
    %205 = arith.mulf %204, %204 : vector<64x32xf32>
    %cst_66 = arith.constant dense<0.000000e+00> : vector<64xf32>
    %206 = vector.multi_reduction <add>, %205, %cst_66 [1] : vector<64x32xf32> to vector<64xf32>
    %207 = vector.shape_cast %206 : vector<64xf32> to vector<64x1xf32>
    %cst_67 = arith.constant 3.200000e+01 : f32
    %208 = vector.broadcast %cst_67 : f32 to vector<64x1xf32>
    %209 = arith.divf %207, %208 : vector<64x1xf32>
    %210 = vector.broadcast %202 : vector<64x1xf32> to vector<64x32xf32>
    %211 = arith.subf %198, %210 : vector<64x32xf32>
    %cst_68 = arith.constant 9.99999974E-6 : f32
    %212 = vector.broadcast %cst_68 : f32 to vector<64x1xf32>
    %213 = arith.addf %209, %212 : vector<64x1xf32>
    %214 = math.rsqrt %213 : vector<64x1xf32>
    %215 = vector.broadcast %214 : vector<64x1xf32> to vector<64x32xf32>
    %216 = arith.mulf %211, %215 : vector<64x32xf32>
    %217 = vector.shape_cast %10 : vector<32xf32> to vector<1x32xf32>
    %218 = vector.broadcast %217 : vector<1x32xf32> to vector<64x32xf32>
    %219 = arith.mulf %216, %218 : vector<64x32xf32>
    %220 = vector.shape_cast %12 : vector<32xf32> to vector<1x32xf32>
    %221 = vector.broadcast %220 : vector<1x32xf32> to vector<64x32xf32>
    %222 = arith.addf %219, %221 : vector<64x32xf32>
    %cst_69 = arith.constant 0.000000e+00 : f32
    %223 = vector.broadcast %cst_69 : f32 to vector<64x32xf32>
    %224 = arith.maximumf %222, %223 : vector<64x32xf32>
    %225 = vector.shape_cast %224 : vector<64x32xf32> to vector<2x32x32xf32>
    %c0_70 = arith.constant 0 : index
    %c0_71 = arith.constant 0 : index
    %c0_72 = arith.constant 0 : index
    %226 = vector.load %arg8[%c0_70, %c0_71, %c0_72] : memref<2x32x32xf32, #tpu.memory_space<vmem>>, vector<2x32x32xf32>
    tpu.vector_store %arg8[%c0_70, %c0_71, %c0_72], %225 {strides = array<i32>} : memref<2x32x32xf32, #tpu.memory_space<vmem>>, vector<2x32x32xf32>,
    return
  }
  func.func @transform_0(%arg0: i32) -> (i32, i32, i32) {
    %c0_i32 = arith.constant 0 : i32
    %c0_i32_0 = arith.constant 0 : i32
    %c0_i32_1 = arith.constant 0 : i32
    return %arg0, %c0_i32, %c0_i32_0 : i32, i32, i32
  }
  func.func @transform_1(%arg0: i32) -> (i32, i32) {
    %c0_i32 = arith.constant 0 : i32
    %c0_i32_0 = arith.constant 0 : i32
    %c0_i32_1 = arith.constant 0 : i32
    return %c0_i32, %c0_i32_0 : i32, i32
  }
  func.func @transform_2(%arg0: i32) -> (i32, i32) {
    %c0_i32 = arith.constant 0 : i32
    %c0_i32_0 = arith.constant 0 : i32
    %c0_i32_1 = arith.constant 0 : i32
    return %c0_i32, %c0_i32_0 : i32, i32
  }
  func.func @transform_3(%arg0: i32) -> (i32, i32) {
    %c0_i32 = arith.constant 0 : i32
    %c0_i32_0 = arith.constant 0 : i32
    %c0_i32_1 = arith.constant 0 : i32
    return %c0_i32, %c0_i32_0 : i32, i32
  }
  func.func @transform_4(%arg0: i32) -> (i32, i32) {
    %c0_i32 = arith.constant 0 : i32
    %c0_i32_0 = arith.constant 0 : i32
    %c0_i32_1 = arith.constant 0 : i32
    return %c0_i32, %c0_i32_0 : i32, i32
  }
  func.func @transform_5(%arg0: i32) -> (i32, i32) {
    %c0_i32 = arith.constant 0 : i32
    %c0_i32_0 = arith.constant 0 : i32
    %c0_i32_1 = arith.constant 0 : i32
    return %c0_i32, %c0_i32_0 : i32, i32
  }
  func.func @transform_6(%arg0: i32) -> (i32, i32) {
    %c0_i32 = arith.constant 0 : i32
    %c0_i32_0 = arith.constant 0 : i32
    %c0_i32_1 = arith.constant 0 : i32
    return %c0_i32, %c0_i32_0 : i32, i32
  }
  func.func @transform_7(%arg0: i32) -> (i32, i32, i32) {
    %c0_i32 = arith.constant 0 : i32
    %c0_i32_0 = arith.constant 0 : i32
    %c0_i32_1 = arith.constant 0 : i32
    return %arg0, %c0_i32, %c0_i32_0 : i32, i32, i32
  }
}

</mosaic_0001>

<llo_original>
// kernel: point_encoder.1
$region0: #{point_encoder.1}
  #allocation0 [shape = 'u32[]', space=smem, size = 0x4, offset = 0x4, fixed_abs, tag = 'smem constant byte address 0x4 - core index']
  #allocation1 [shape = 'u32[72,128]{1,0:T(1,128)}', space=vmem, size = 0x9000, scoped, tag = 'internal scratch']
  #allocation2 [shape = 'bf16[2,32,32]{2,1,0:T(8,128)(2,1)}', space=vmem, size = 0x4000, scoped, tag = 'scratch operand']
  %s0 = inlined_call_operand.hbm [shape: f32[2,8,16], index: 0, kind: input, shape index: {}]
  %s1 = inlined_call_operand.hbm [shape: bf16[16,32], index: 1, kind: input, shape index: {}]
  %s2 = inlined_call_operand.hbm [shape: bf16[32,32], index: 2, kind: input, shape index: {}]
  %s3 = inlined_call_operand.hbm [shape: bf16[32,48], index: 3, kind: input, shape index: {}]
  %s4 = inlined_call_operand.hbm [shape: bf16[32,32], index: 4, kind: input, shape index: {}]
  %s5 = inlined_call_operand.hbm [shape: bf16[32,32], index: 5, kind: input, shape index: {}]
  %s6 = inlined_call_operand.hbm [shape: f32[8,32], index: 6, kind: input, shape index: {}]
  %s7 = inlined_call_operand.hbm [shape: f32[2,32,32], index: 7, kind: output, shape index: {}]
  %s8 = sld [smem:[#allocation0]]
  $region66: #{point_encoder.1} parent=0
    _
  %s10 = ssub.s32 1, %s8
  %s11 = scalar_select 0, %s10, %s8
  $region1: #{point_encoder.1} parent=0
    #allocation3 [shape = 'u8[8192]{0}', space=vmem, size = 0x2000, scoped, tag = 'input window, operand 0, single buffered']
    #allocation4 [shape = 's32[1]{0}', space=sflag, size = 0x4, scoped, tag = 'scoped memory for point_encoder.1']
    #allocation5 [shape = 's32[1]{0}', space=sflag, size = 0x4, scoped, tag = 'scoped memory for point_encoder.1']
    #allocation6 [shape = 'u8[4096]{0}', space=vmem, size = 0x1000, scoped, tag = 'input window, operand 1, single buffered']
    #allocation7 [shape = 's32[1]{0}', space=sflag, size = 0x4, scoped, tag = 'scoped memory for point_encoder.1']
    #allocation8 [shape = 'u8[8192]{0}', space=vmem, size = 0x2000, scoped, tag = 'input window, operand 2, single buffered']
    #allocation9 [shape = 'u8[8192]{0}', space=vmem, size = 0x2000, scoped, tag = 'input window, operand 3, single buffered']
    #allocation10 [shape = 's32[1]{0}', space=sflag, size = 0x4, scoped, tag = 'scoped memory for point_encoder.1']
    #allocation11 [shape = 'u8[8192]{0}', space=vmem, size = 0x2000, scoped, tag = 'input window, operand 4, single buffered']
    #allocation12 [shape = 'u8[8192]{0}', space=vmem, size = 0x2000, scoped, tag = 'input window, operand 5, single buffered']
    #allocation13 [shape = 's32[1]{0}', space=sflag, size = 0x4, scoped, tag = 'scoped memory for point_encoder.1']
    #allocation14 [shape = 'u8[4096]{0}', space=vmem, size = 0x1000, scoped, tag = 'input window, operand 6, single buffered']
    #allocation15 [shape = 'u8[32768]{0}', space=vmem, size = 0x8000, scoped, tag = 'output window, operand 0, single buffered']
    %12 = vsyncpa [#allocation4], 0
    %13 = vsyncpa [#allocation7], 0
    %14 = vsyncpa [#allocation10], 0
    %15 = vsyncpa [#allocation13], 0
    %16 = vsyncpa [#allocation5], 0
    // Predicated region
    $region2: #{point_encoder.1} parent=1 // pred_check
      _
    $region3: #{point_encoder.1} parent=1 // pred_check_branch
      %18 = sbr.rel (0) target = $region5
    $region4: #{point_encoder.1} parent=1 // pred_region
      %20 = vsyncadd [#allocation4], 0
      %s21 = sshll.u32 %s0, 4
      %s22 = int_to_ptr.hbm [resolvable:$true] %s21
      %s23 = sshll.u32 [#allocation3], 4
      %s24 = int_to_ptr.vmem [resolvable:$true] %s23
      %29 = dma.hbm_to_vmem [thread:$0]  %s22, 256, %s24, [#allocation4], 128, 128, 8
    $region5: #{point_encoder.1} parent=1 // pred_fallthru
      _
    // Predicated region
    $region6: #{point_encoder.1} parent=1 // pred_check
      _
    $region7: #{point_encoder.1} parent=1 // pred_check_branch
      %31 = sbr.rel (0) target = $region9
    $region8: #{point_encoder.1} parent=1 // pred_region
      %33 = vsyncadd [#allocation7], 0
      %s34 = sshll.u32 %s1, 4
      %s35 = int_to_ptr.hbm [resolvable:$true] %s34
      %s36 = sshll.u32 [#allocation6], 4
      %s37 = int_to_ptr.vmem [resolvable:$true] %s36
      %42 = dma.hbm_to_vmem [thread:$0]  %s35, 128, %s37, [#allocation7], 64, 64, 4
    $region9: #{point_encoder.1} parent=1 // pred_fallthru
      _
    // Predicated region
    $region10: #{point_encoder.1} parent=1 // pred_check
      _
    $region11: #{point_encoder.1} parent=1 // pred_check_branch
      %44 = sbr.rel (0) target = $region13
    $region12: #{point_encoder.1} parent=1 // pred_region
      %46 = vsyncadd [#allocation7], 0
      %s47 = sshll.u32 %s2, 4
      %s48 = int_to_ptr.hbm [resolvable:$true] %s47
      %s49 = sshll.u32 [#allocation8], 4
      %s50 = int_to_ptr.vmem [resolvable:$true] %s49
      %55 = dma.hbm_to_vmem [thread:$0]  %s48, 256, %s50, [#allocation7], 64, 64, 4
    $region13: #{point_encoder.1} parent=1 // pred_fallthru
      _
    // Predicated region
    $region14: #{point_encoder.1} parent=1 // pred_check
      _
    $region15: #{point_encoder.1} parent=1 // pred_check_branch
      %57 = sbr.rel (0) target = $region17
    $region16: #{point_encoder.1} parent=1 // pred_region
      %59 = vsyncadd [#allocation10], 0
      %s60 = sshll.u32 %s3, 4
      %s61 = int_to_ptr.hbm [resolvable:$true] %s60
      %s62 = sshll.u32 [#allocation9], 4
      %s63 = int_to_ptr.vmem [resolvable:$true] %s62
      %68 = dma.hbm_to_vmem [thread:$0]  %s61, 256, %s63, [#allocation10], 64, 64, 4
    $region17: #{point_encoder.1} parent=1 // pred_fallthru
      _
    // Predicated region
    $region18: #{point_encoder.1} parent=1 // pred_check
      _
    $region19: #{point_encoder.1} parent=1 // pred_check_branch
      %70 = sbr.rel (0) target = $region21
    $region20: #{point_encoder.1} parent=1 // pred_region
      %72 = vsyncadd [#allocation10], 0
      %s73 = sshll.u32 %s4, 4
      %s74 = int_to_ptr.hbm [resolvable:$true] %s73
      %s75 = sshll.u32 [#allocation11], 4
      %s76 = int_to_ptr.vmem [resolvable:$true] %s75
      %81 = dma.hbm_to_vmem [thread:$0]  %s74, 256, %s76, [#allocation10], 64, 64, 4
    $region21: #{point_encoder.1} parent=1 // pred_fallthru
      _
    // Predicated region
    $region22: #{point_encoder.1} parent=1 // pred_check
      _
    $region23: #{point_encoder.1} parent=1 // pred_check_branch
      %83 = sbr.rel (0) target = $region25
    $region24: #{point_encoder.1} parent=1 // pred_region
      %85 = vsyncadd [#allocation13], 0
      %s86 = sshll.u32 %s5, 4
      %s87 = int_to_ptr.hbm [resolvable:$true] %s86
      %s88 = sshll.u32 [#allocation12], 4
      %s89 = int_to_ptr.vmem [resolvable:$true] %s88
      %94 = dma.hbm_to_vmem [thread:$0]  %s87, 256, %s89, [#allocation13], 64, 64, 4
    $region25: #{point_encoder.1} parent=1 // pred_fallthru
      _
    // Predicated region
    $region26: #{point_encoder.1} parent=1 // pred_check
      _
    $region27: #{point_encoder.1} parent=1 // pred_check_branch
      %96 = sbr.rel (0) target = $region29
    $region28: #{point_encoder.1} parent=1 // pred_region
      %98 = vsyncadd [#allocation13], 0
      %s100 = sshll.u32 %s6, 4
      %s101 = int_to_ptr.hbm [resolvable:$true] %s100
      %s102 = sshll.u32 [#allocation14], 4
      %s103 = int_to_ptr.vmem [resolvable:$true] %s102
      %105 = dma.hbm_to_vmem [thread:$0]  %s101, 128, %s103, [#allocation13]
    $region29: #{point_encoder.1} parent=1 // pred_fallthru
      _
    // Predicated region
    $region30: #{point_encoder.1} parent=1 // pred_check
      _
    $region31: #{point_encoder.1} parent=1 // pred_check_branch
      %107 = sbr.rel (0) target = $region33
    $region32: #{point_encoder.1} parent=1 // pred_region
      %109 = dma.done [#allocation4], 256
    $region33: #{point_encoder.1} parent=1 // pred_fallthru
      _
    // Predicated region
    $region34: #{point_encoder.1} parent=1 // pred_check
      _
    $region35: #{point_encoder.1} parent=1 // pred_check_branch
      %111 = sbr.rel (0) target = $region37
    $region36: #{point_encoder.1} parent=1 // pred_region
      %113 = dma.done [#allocation7], 128
    $region37: #{point_encoder.1} parent=1 // pred_fallthru
      _
    // Predicated region
    $region38: #{point_encoder.1} parent=1 // pred_check
      _
    $region39: #{point_encoder.1} parent=1 // pred_check_branch
      %115 = sbr.rel (0) target = $region41
    $region40: #{point_encoder.1} parent=1 // pred_region
      %117 = dma.done [#allocation7], 256
    $region41: #{point_encoder.1} parent=1 // pred_fallthru
      _
    // Predicated region
    $region42: #{point_encoder.1} parent=1 // pred_check
      _
    $region43: #{point_encoder.1} parent=1 // pred_check_branch
      %119 = sbr.rel (0) target = $region45
    $region44: #{point_encoder.1} parent=1 // pred_region
      %121 = dma.done [#allocation10], 256
    $region45: #{point_encoder.1} parent=1 // pred_fallthru
      _
    // Predicated region
    $region46: #{point_encoder.1} parent=1 // pred_check
      _
    $region47: #{point_encoder.1} parent=1 // pred_check_branch
      %123 = sbr.rel (0) target = $region49
    $region48: #{point_encoder.1} parent=1 // pred_region
      %125 = dma.done [#allocation10], 256
    $region49: #{point_encoder.1} parent=1 // pred_fallthru
      _
    // Predicated region
    $region50: #{point_encoder.1} parent=1 // pred_check
      _
    $region51: #{point_encoder.1} parent=1 // pred_check_branch
      %127 = sbr.rel (0) target = $region53
    $region52: #{point_encoder.1} parent=1 // pred_region
      %129 = dma.done [#allocation13], 256
    $region53: #{point_encoder.1} parent=1 // pred_fallthru
      _
    // Predicated region
    $region54: #{point_encoder.1} parent=1 // pred_check
      _
    $region55: #{point_encoder.1} parent=1 // pred_check_branch
      %131 = sbr.rel (0) target = $region57
    $region56: #{point_encoder.1} parent=1 // pred_region
      %133 = dma.done [#allocation13], 128
    $region57: #{point_encoder.1} parent=1 // pred_fallthru
      _
    %v135 = vld [vmem:[#allocation14] sm:$0xff]
    %v136 = vld [vmem:[#allocation3] sm:$0xff]
    %v137 = vld [vmem:[#allocation3 + $0x8] sm:$0xff]
    %v138 = vpack.c.bf16 %v137, %v136
    %v139 = vld [vmem:[#allocation6] sm:$0xf]
    %v140 = vld [vmem:[#allocation6 + $0x4] sm:$0xf]
    %v143 = vunpack.c.l.b16 %v139
    %v144 = vunpack.c.l.b16 %v140
    %v145 = vpack.c.b16 %v144, %v143
    %vm147 = vcmask 130048
    %v149 = vsel %vm147, %v138, 0
    %151 = vmatpush.bf16.msra.mxu0 0
    %152 = vmatpush.bf16.msra.mxu0 0
    %153 = vmatpush.bf16.msra.mxu0 0
    %154 = vmatpush.bf16.msra.mxu0 0
    %155 = vmatpush.bf16.msra.mxu0 0
    %156 = vmatpush.bf16.msra.mxu0 0
    %157 = vmatpush.bf16.msra.mxu0 0
    %158 = vmatpush.bf16.msra.mxu0 %v145
    %159 = vmatmul.bf16.gmra.mxu0 %v149
    %v160 = vpop.f32.mrf.mxu0
    %v161 = vadd.f32 0.0, %v160
    %v162 = vpop.f32.mrf.mxu0
    %v163 = vadd.f32 0.0, %v162
    %164 = vdwg.mxu0
    %vm165 = vcmask 261120
    %v166 = vsel %vm165, %v161, 0.0
    %167 = vadd.xlane.f32.xlu0 %v166
    %v168 = vpop.xlane.xlu0 %167
    %v169 = vsel %vm165, %v163, 0.0
    %170 = vadd.xlane.f32.xlu0 %v169
    %v171 = vpop.xlane.xlu0 %170
    %v172 = vrcp.pop 32.0
    %v173 = vmul.f32 32.0, %v172
    %v174 = vsub.f32 1.0, %v173
    %v175 = vmul.f32 %v172, %v174
    %v176 = vadd.f32 %v172, %v175
    %vm177 = vweird.f32 %v172
    %v178 = vsel %vm177, %v172, %v176
    %v179 = vmul.f32 %v168, %v178
    %v180 = vmul.f32 %v171, %v178
    %v181 = vsub.f32 %v161, %v179
    %v182 = vsub.f32 %v163, %v180
    %v183 = vmul.f32 %v181, %v181
    %v184 = vmul.f32 %v182, %v182
    %v185 = vsel %vm165, %v183, 0.0
    %186 = vadd.xlane.f32.xlu0 %v185
    %v187 = vpop.xlane.xlu0 %186
    %v188 = vsel %vm165, %v184, 0.0
    %189 = vadd.xlane.f32.xlu0 %v188
    %v190 = vpop.xlane.xlu0 %189
    %v191 = vmul.f32 %v187, %v178
    %v192 = vmul.f32 %v190, %v178
    %v193 = vadd.f32 %v191, 1e-05
    %v194 = vadd.f32 %v192, 1e-05
    %v195 = vrsqrt.pop %v193
    %v196 = vmul.f32 %v195, %v193
    %v197 = vmul.f32 %v196, %v195
    %v198 = vmul.f32 0.5, %v197
    %v199 = vsub.f32 1.5, %v198
    %v200 = vmul.f32 %v195, %v199
    %vm201 = vweird.f32 %v193
    %vm202 = vweird.f32 %v195
    %vm203 = vmor %vm201, %vm202
    %v204 = vsel %vm203, %v195, %v200
    %v205 = vrsqrt.pop %v194
    %v206 = vmul.f32 %v205, %v194
    %v207 = vmul.f32 %v206, %v205
    %v208 = vmul.f32 0.5, %v207
    %v209 = vsub.f32 1.5, %v208
    %v210 = vmul.f32 %v205, %v209
    %vm211 = vweird.f32 %v194
    %vm212 = vweird.f32 %v205
    %vm213 = vmor %vm211, %vm212
    %v214 = vsel %vm213, %v205, %v210
    %v215 = vmul.f32 %v181, %v204
    %v216 = vmul.f32 %v182, %v214
    %v217 = vperm.slane %v135, 0
    %v218 = vmul.f32 %v215, %v217
    %v219 = vmul.f32 %v216, %v217
    %v220 = vperm.slane %v135, 1
    %v221 = vadd.f32 %v218, %v220
    %v222 = vadd.f32 %v219, %v220
    %v223 = vmax.f32 %v221, 0.0
    %v224 = vmax.f32 %v222, 0.0
    %v225 = vpack.c.bf16 %v224, %v223
    %v226 = vld [vmem:[#allocation8] sm:$0xf]
    %v227 = vld [vmem:[#allocation8 + $0x4] sm:$0xf]
    %v228 = vld [vmem:[#allocation8 + $0x8] sm:$0xf]
    %v229 = vld [vmem:[#allocation8 + $0xc] sm:$0xf]
    %v234 = vunpack.c.l.b16 %v226
    %v235 = vunpack.c.l.b16 %v227
    %v236 = vunpack.c.l.b16 %v228
    %v237 = vunpack.c.l.b16 %v229
    %v238 = vpack.c.b16 %v235, %v234
    %v239 = vpack.c.b16 %v237, %v236
    %v243 = vsel %vm165, %v225, 0
    %245 = vmatpush.bf16.msra.mxu0 0
    %246 = vmatpush.bf16.msra.mxu0 0
    %247 = vmatpush.bf16.msra.mxu0 0
    %248 = vmatpush.bf16.msra.mxu0 0
    %249 = vmatpush.bf16.msra.mxu0 0
    %250 = vmatpush.bf16.msra.mxu0 0
    %251 = vmatpush.bf16.msra.mxu0 %v239
    %252 = vmatpush.bf16.msra.mxu0 %v238
    %253 = vmatmul.bf16.gmra.mxu0 %v243
    %v254 = vpop.f32.mrf.mxu0
    %v255 = vadd.f32 0.0, %v254
    %v256 = vpop.f32.mrf.mxu0
    %v257 = vadd.f32 0.0, %v256
    %258 = vdwg.mxu0
    %v259 = vsel %vm165, %v255, 0.0
    %260 = vadd.xlane.f32.xlu0 %v259
    %v261 = vpop.xlane.xlu0 %260
    %v262 = vsel %vm165, %v257, 0.0
    %263 = vadd.xlane.f32.xlu0 %v262
    %v264 = vpop.xlane.xlu0 %263
    %v265 = vmul.f32 %v261, %v178
    %v266 = vmul.f32 %v264, %v178
    %v267 = vsub.f32 %v255, %v265
    %v268 = vsub.f32 %v257, %v266
    %v269 = vmul.f32 %v267, %v267
    %v270 = vmul.f32 %v268, %v268
    %v271 = vsel %vm165, %v269, 0.0
    %272 = vadd.xlane.f32.xlu0 %v271
    %v273 = vpop.xlane.xlu0 %272
    %v274 = vsel %vm165, %v270, 0.0
    %275 = vadd.xlane.f32.xlu0 %v274
    %v276 = vpop.xlane.xlu0 %275
    %v277 = vmul.f32 %v273, %v178
    %v278 = vmul.f32 %v276, %v178
    %v279 = vadd.f32 %v277, 1e-05
    %v280 = vadd.f32 %v278, 1e-05
    %v281 = vrsqrt.pop %v279
    %v282 = vmul.f32 %v281, %v279
    %v283 = vmul.f32 %v282, %v281
    %v284 = vmul.f32 0.5, %v283
    %v285 = vsub.f32 1.5, %v284
    %v286 = vmul.f32 %v281, %v285
    %vm287 = vweird.f32 %v279
    %vm288 = vweird.f32 %v281
    %vm289 = vmor %vm287, %vm288
    %v290 = vsel %vm289, %v281, %v286
    %v291 = vrsqrt.pop %v280
    %v292 = vmul.f32 %v291, %v280
    %v293 = vmul.f32 %v292, %v291
    %v294 = vmul.f32 0.5, %v293
    %v295 = vsub.f32 1.5, %v294
    %v296 = vmul.f32 %v291, %v295
    %vm297 = vweird.f32 %v280
    %vm298 = vweird.f32 %v291
    %vm299 = vmor %vm297, %vm298
    %v300 = vsel %vm299, %v291, %v296
    %v301 = vmul.f32 %v267, %v290
    %v302 = vmul.f32 %v268, %v300
    %v303 = vperm.slane %v135, 2
    %v304 = vmul.f32 %v301, %v303
    %v305 = vmul.f32 %v302, %v303
    %v306 = vperm.slane %v135, 3
    %v307 = vadd.f32 %v304, %v306
    %v308 = vadd.f32 %v305, %v306
    %v309 = vmax.f32 %v307, 0.0
    %v310 = vmax.f32 %v308, 0.0
    %v311 = vld [vmem:[#allocation9] sm:$0xf]
    %v312 = vld [vmem:[#allocation9 + $0x4] sm:$0xf]
    %v313 = vld [vmem:[#allocation9 + $0x8] sm:$0xf]
    %v314 = vld [vmem:[#allocation9 + $0xc] sm:$0xf]
    %v315 = vld [vmem:[#allocation11] sm:$0xf]
    %v316 = vld [vmem:[#allocation11 + $0x4] sm:$0xf]
    %v317 = vld [vmem:[#allocation11 + $0x8] sm:$0xf]
    %v318 = vld [vmem:[#allocation11 + $0xc] sm:$0xf]
    %v319 = vpack.c.bf16 %v310, %v309
    %v324 = vunpack.c.l.b16 %v311
    %v325 = vunpack.c.l.b16 %v312
    %v326 = vunpack.c.l.b16 %v313
    %v327 = vunpack.c.l.b16 %v314
    %v328 = vpack.c.b16 %v325, %v324
    %v329 = vpack.c.b16 %v327, %v326
    %v333 = vsel %vm165, %v319, 0
    %335 = vmatpush.bf16.msra.mxu0 0
    %336 = vmatpush.bf16.msra.mxu0 0
    %337 = vmatpush.bf16.msra.mxu0 0
    %338 = vmatpush.bf16.msra.mxu0 0
    %339 = vmatpush.bf16.msra.mxu0 0
    %340 = vmatpush.bf16.msra.mxu0 0
    %341 = vmatpush.bf16.msra.mxu0 %v329
    %342 = vmatpush.bf16.msra.mxu0 %v328
    %343 = vmatmul.bf16.gmra.mxu0 %v333
    %v344 = vpop.f32.mrf.mxu0
    %v345 = vadd.f32 0.0, %v344
    %v346 = vpop.f32.mrf.mxu0
    %v347 = vadd.f32 0.0, %v346
    %348 = vdwg.mxu0
    %v349 = vpack.c.bf16 %v345, %v345
    %v350 = vpack.c.bf16 %v347, %v347
    %v352 = vunpack.c.l.b16 %v349
    %v353 = vpack.c.b16 %v352, %v352
    %354 = vrot.lane.b32.xlu0 %v353, 120
    %v355 = vpop.permute.xlu0 %354
    %vm356 = vcmask 64512
    %v358 = vsel %vm356, %v349, 0
    %v361 = vsel %vm356, %v355, 0
    %363 = vmatpush.bf16.xpose.msra.mxu0 0
    %364 = vmatpush.bf16.xpose.msra.mxu0 0
    %365 = vmatpush.bf16.xpose.msra.mxu0 0
    %366 = vmatpush.bf16.xpose.msra.mxu0 0
    %367 = vmatpush.bf16.xpose.msra.mxu0 0
    %368 = vmatpush.bf16.xpose.msra.mxu0 0
    %369 = vmatpush.bf16.xpose.msra.mxu0 0
    %370 = vmatpush.bf16.xpose.msra.mxu0 %v361
    %371 = vmatmul.bf16.gmra.mxu0 %v358
    %v372 = vpop.f32.mrf.mxu0
    %v373 = vadd.f32 0.0, %v372
    %v374 = vpop.f32.mrf.mxu0
    %375 = vdwg.mxu0
    %v377 = vunpack.c.l.b16 %v350
    %v378 = vpack.c.b16 %v377, %v377
    %379 = vrot.lane.b32.xlu0 %v378, 120
    %v380 = vpop.permute.xlu0 %379
    %v382 = vsel %vm356, %v350, 0
    %v385 = vsel %vm356, %v380, 0
    %387 = vmatpush.bf16.xpose.msra.mxu0 0
    %388 = vmatpush.bf16.xpose.msra.mxu0 0
    %389 = vmatpush.bf16.xpose.msra.mxu0 0
    %390 = vmatpush.bf16.xpose.msra.mxu0 0
    %391 = vmatpush.bf16.xpose.msra.mxu0 0
    %392 = vmatpush.bf16.xpose.msra.mxu0 0
    %393 = vmatpush.bf16.xpose.msra.mxu0 0
    %394 = vmatpush.bf16.xpose.msra.mxu0 %v385
    %395 = vmatmul.bf16.gmra.mxu0 %v382
    %v396 = vpop.f32.mrf.mxu0
    %v397 = vadd.f32 0.0, %v396
    %v398 = vpop.f32.mrf.mxu0
    %399 = vdwg.mxu0
    %v400 = vsel %vm356, %v373, -inf
    %v401 = vrot.slane %v400, 4
    %v402 = vmax.f32 %v400, %v401
    %v403 = vrot.slane %v402, 2
    %v404 = vmax.f32 %v402, %v403
    %v405 = vrot.slane %v404, 1
    %v406 = vmax.f32 %v404, %v405
    %v407 = vsel %vm356, %v397, -inf
    %v408 = vrot.slane %v407, 4
    %v409 = vmax.f32 %v407, %v408
    %v410 = vrot.slane %v409, 2
    %v411 = vmax.f32 %v409, %v410
    %v412 = vrot.slane %v411, 1
    %v413 = vmax.f32 %v411, %v412
    %v414 = vsub.f32 %v373, %v406
    %v415 = vsub.f32 %v397, %v413
    %v416 = vmul.f32 %v414, 1.442695
    %v417 = vpow.pop %v416
    %v418 = vmul.f32 %v415, 1.442695
    %v419 = vpow.pop %v418
    %v420 = vsel %vm356, %v417, 0.0
    %v421 = vrot.slane %v420, 4
    %v422 = vadd.f32 %v420, %v421
    %v423 = vrot.slane %v422, 2
    %v424 = vadd.f32 %v422, %v423
    %v425 = vrot.slane %v424, 1
    %v426 = vadd.f32 %v424, %v425
    %v427 = vsel %vm356, %v419, 0.0
    %v428 = vrot.slane %v427, 4
    %v429 = vadd.f32 %v427, %v428
    %v430 = vrot.slane %v429, 2
    %v431 = vadd.f32 %v429, %v430
    %v432 = vrot.slane %v431, 1
    %v433 = vadd.f32 %v431, %v432
    %v434 = vrcp.pop %v426
    %v435 = vrcp.pop %v433
    %v436 = vmul.f32 %v417, %v434
    %v437 = vmul.f32 %v419, %v435
    %v438 = vpack.c.bf16 %v436, %v436
    %v439 = vpack.c.bf16 %v437, %v437
    %440 = vrot.lane.b32.xlu0 %v353, 112
    %v441 = vpop.permute.xlu0 %440
    %v443 = vsel %vm356, %v438, 0
    %vm445 = vcmask 1043456
    %v447 = vsel %vm445, %v441, 0
    %449 = vmatpush.bf16.msra.mxu0 0
    %450 = vmatpush.bf16.msra.mxu0 0
    %451 = vmatpush.bf16.msra.mxu0 0
    %452 = vmatpush.bf16.msra.mxu0 0
    %453 = vmatpush.bf16.msra.mxu0 0
    %454 = vmatpush.bf16.msra.mxu0 0
    %455 = vmatpush.bf16.msra.mxu0 0
    %456 = vmatpush.bf16.msra.mxu0 %v447
    %457 = vmatmul.bf16.gmra.mxu0 %v443
    %v458 = vpop.f32.mrf.mxu0
    %v459 = vadd.f32 0.0, %v458
    %v460 = vpop.f32.mrf.mxu0
    %461 = vdwg.mxu0
    %462 = vrot.lane.b32.xlu0 %v378, 112
    %v463 = vpop.permute.xlu0 %462
    %v465 = vsel %vm356, %v439, 0
    %v468 = vsel %vm445, %v463, 0
    %470 = vmatpush.bf16.msra.mxu0 0
    %471 = vmatpush.bf16.msra.mxu0 0
    %472 = vmatpush.bf16.msra.mxu0 0
    %473 = vmatpush.bf16.msra.mxu0 0
    %474 = vmatpush.bf16.msra.mxu0 0
    %475 = vmatpush.bf16.msra.mxu0 0
    %476 = vmatpush.bf16.msra.mxu0 0
    %477 = vmatpush.bf16.msra.mxu0 %v468
    %478 = vmatmul.bf16.gmra.mxu0 %v465
    %v479 = vpop.f32.mrf.mxu0
    %v480 = vadd.f32 0.0, %v479
    %v481 = vpop.f32.mrf.mxu0
    %482 = vdwg.mxu0
    %v483 = vpack.c.bf16 %v480, %v459
    %v488 = vunpack.c.l.b16 %v315
    %v489 = vunpack.c.l.b16 %v316
    %v490 = vunpack.c.l.b16 %v317
    %v491 = vunpack.c.l.b16 %v318
    %v492 = vpack.c.b16 %v489, %v488
    %v493 = vpack.c.b16 %v491, %v490
    %v497 = vsel %vm165, %v483, 0
    %499 = vmatpush.bf16.msra.mxu0 0
    %500 = vmatpush.bf16.msra.mxu0 0
    %501 = vmatpush.bf16.msra.mxu0 0
    %502 = vmatpush.bf16.msra.mxu0 0
    %503 = vmatpush.bf16.msra.mxu0 0
    %504 = vmatpush.bf16.msra.mxu0 0
    %505 = vmatpush.bf16.msra.mxu0 %v493
    %506 = vmatpush.bf16.msra.mxu0 %v492
    %507 = vmatmul.bf16.gmra.mxu0 %v497
    %v508 = vpop.f32.mrf.mxu0
    %v509 = vadd.f32 0.0, %v508
    %v510 = vpop.f32.mrf.mxu0
    %v511 = vadd.f32 0.0, %v510
    %512 = vdwg.mxu0
    %v513 = vpack.c.bf16 %v509, %v509
    %v514 = vpack.c.bf16 %v511, %v511
    %vm515 = vcmask 257024
    %516 = vst.msk [vmem:[#allocation2] sm:$0xf] %vm515, %v513
    %517 = vst.msk [vmem:[#allocation2 + $0x10] sm:$0xf] %vm515, %v514
    %v518 = vpack.c.bf16 %v511, %v509
    %v520 = vsel %vm165, %v518, 0
    %522 = vmatpush.bf16.msra.mxu0 0
    %523 = vmatpush.bf16.msra.mxu0 0
    %524 = vmatpush.bf16.msra.mxu0 0
    %525 = vmatpush.bf16.msra.mxu0 0
    %526 = vmatpush.bf16.msra.mxu0 0
    %527 = vmatpush.bf16.msra.mxu0 0
    %528 = vmatpush.bf16.msra.mxu0 %v329
    %529 = vmatpush.bf16.msra.mxu0 %v328
    %530 = vmatmul.bf16.gmra.mxu0 %v520
    %v531 = vpop.f32.mrf.mxu0
    %v532 = vadd.f32 0.0, %v531
    %v533 = vpop.f32.mrf.mxu0
    %v534 = vadd.f32 0.0, %v533
    %535 = vdwg.mxu0
    %v536 = vpack.c.bf16 %v532, %v532
    %v537 = vpack.c.bf16 %v534, %v534
    %v539 = vunpack.c.l.b16 %v536
    %v540 = vpack.c.b16 %v539, %v539
    %541 = vrot.lane.b32.xlu0 %v540, 120
    %v542 = vpop.permute.xlu0 %541
    %v544 = vsel %vm356, %v536, 0
    %v547 = vsel %vm356, %v542, 0
    %549 = vmatpush.bf16.xpose.msra.mxu0 0
    %550 = vmatpush.bf16.xpose.msra.mxu0 0
    %551 = vmatpush.bf16.xpose.msra.mxu0 0
    %552 = vmatpush.bf16.xpose.msra.mxu0 0
    %553 = vmatpush.bf16.xpose.msra.mxu0 0
    %554 = vmatpush.bf16.xpose.msra.mxu0 0
    %555 = vmatpush.bf16.xpose.msra.mxu0 0
    %556 = vmatpush.bf16.xpose.msra.mxu0 %v547
    %557 = vmatmul.bf16.gmra.mxu0 %v544
    %v558 = vpop.f32.mrf.mxu0
    %v559 = vadd.f32 0.0, %v558
    %v560 = vpop.f32.mrf.mxu0
    %561 = vdwg.mxu0
    %v563 = vunpack.c.l.b16 %v537
    %v564 = vpack.c.b16 %v563, %v563
    %565 = vrot.lane.b32.xlu0 %v564, 120
    %v566 = vpop.permute.xlu0 %565
    %v568 = vsel %vm356, %v537, 0
    %v571 = vsel %vm356, %v566, 0
    %573 = vmatpush.bf16.xpose.msra.mxu0 0
    %574 = vmatpush.bf16.xpose.msra.mxu0 0
    %575 = vmatpush.bf16.xpose.msra.mxu0 0
    %576 = vmatpush.bf16.xpose.msra.mxu0 0
    %577 = vmatpush.bf16.xpose.msra.mxu0 0
    %578 = vmatpush.bf16.xpose.msra.mxu0 0
    %579 = vmatpush.bf16.xpose.msra.mxu0 0
    %580 = vmatpush.bf16.xpose.msra.mxu0 %v571
    %581 = vmatmul.bf16.gmra.mxu0 %v568
    %v582 = vpop.f32.mrf.mxu0
    %v583 = vadd.f32 0.0, %v582
    %v584 = vpop.f32.mrf.mxu0
    %585 = vdwg.mxu0
    %v586 = vsel %vm356, %v559, -inf
    %v587 = vrot.slane %v586, 4
    %v588 = vmax.f32 %v586, %v587
    %v589 = vrot.slane %v588, 2
    %v590 = vmax.f32 %v588, %v589
    %v591 = vrot.slane %v590, 1
    %v592 = vmax.f32 %v590, %v591
    %v593 = vsel %vm356, %v583, -inf
    %v594 = vrot.slane %v593, 4
    %v595 = vmax.f32 %v593, %v594
    %v596 = vrot.slane %v595, 2
    %v597 = vmax.f32 %v595, %v596
    %v598 = vrot.slane %v597, 1
    %v599 = vmax.f32 %v597, %v598
    %v600 = vsub.f32 %v559, %v592
    %v601 = vsub.f32 %v583, %v599
    %v602 = vmul.f32 %v600, 1.442695
    %v603 = vpow.pop %v602
    %v604 = vmul.f32 %v601, 1.442695
    %v605 = vpow.pop %v604
    %v606 = vsel %vm356, %v603, 0.0
    %v607 = vrot.slane %v606, 4
    %v608 = vadd.f32 %v606, %v607
    %v609 = vrot.slane %v608, 2
    %v610 = vadd.f32 %v608, %v609
    %v611 = vrot.slane %v610, 1
    %v612 = vadd.f32 %v610, %v611
    %v613 = vsel %vm356, %v605, 0.0
    %v614 = vrot.slane %v613, 4
    %v615 = vadd.f32 %v613, %v614
    %v616 = vrot.slane %v615, 2
    %v617 = vadd.f32 %v615, %v616
    %v618 = vrot.slane %v617, 1
    %v619 = vadd.f32 %v617, %v618
    %v620 = vrcp.pop %v612
    %v621 = vrcp.pop %v619
    %v622 = vmul.f32 %v603, %v620
    %v623 = vmul.f32 %v605, %v621
    %v624 = vpack.c.bf16 %v622, %v622
    %v625 = vpack.c.bf16 %v623, %v623
    %626 = vrot.lane.b32.xlu0 %v540, 112
    %v627 = vpop.permute.xlu0 %626
    %v629 = vsel %vm356, %v624, 0
    %v632 = vsel %vm445, %v627, 0
    %634 = vmatpush.bf16.msra.mxu0 0
    %635 = vmatpush.bf16.msra.mxu0 0
    %636 = vmatpush.bf16.msra.mxu0 0
    %637 = vmatpush.bf16.msra.mxu0 0
    %638 = vmatpush.bf16.msra.mxu0 0
    %639 = vmatpush.bf16.msra.mxu0 0
    %640 = vmatpush.bf16.msra.mxu0 0
    %641 = vmatpush.bf16.msra.mxu0 %v632
    %642 = vmatmul.bf16.gmra.mxu0 %v629
    %v643 = vpop.f32.mrf.mxu0
    %v644 = vadd.f32 0.0, %v643
    %v645 = vpop.f32.mrf.mxu0
    %646 = vdwg.mxu0
    %647 = vrot.lane.b32.xlu0 %v564, 112
    %v648 = vpop.permute.xlu0 %647
    %v650 = vsel %vm356, %v625, 0
    %v653 = vsel %vm445, %v648, 0
    %655 = vmatpush.bf16.msra.mxu0 0
    %656 = vmatpush.bf16.msra.mxu0 0
    %657 = vmatpush.bf16.msra.mxu0 0
    %658 = vmatpush.bf16.msra.mxu0 0
    %659 = vmatpush.bf16.msra.mxu0 0
    %660 = vmatpush.bf16.msra.mxu0 0
    %661 = vmatpush.bf16.msra.mxu0 0
    %662 = vmatpush.bf16.msra.mxu0 %v653
    %663 = vmatmul.bf16.gmra.mxu0 %v650
    %v664 = vpop.f32.mrf.mxu0
    %v665 = vadd.f32 0.0, %v664
    %v666 = vpop.f32.mrf.mxu0
    %667 = vdwg.mxu0
    %v668 = vpack.c.bf16 %v665, %v644
    %v670 = vsel %vm165, %v668, 0
    %672 = vmatpush.bf16.msra.mxu0 0
    %673 = vmatpush.bf16.msra.mxu0 0
    %674 = vmatpush.bf16.msra.mxu0 0
    %675 = vmatpush.bf16.msra.mxu0 0
    %676 = vmatpush.bf16.msra.mxu0 0
    %677 = vmatpush.bf16.msra.mxu0 0
    %678 = vmatpush.bf16.msra.mxu0 %v493
    %679 = vmatpush.bf16.msra.mxu0 %v492
    %680 = vmatmul.bf16.gmra.mxu0 %v670
    %v681 = vpop.f32.mrf.mxu0
    %v682 = vadd.f32 0.0, %v681
    %v683 = vpop.f32.mrf.mxu0
    %v684 = vadd.f32 0.0, %v683
    %685 = vdwg.mxu0
    %v686 = vpack.c.bf16 %v682, %v682
    %v687 = vpack.c.bf16 %v684, %v684
    %688 = vst.msk [vmem:[#allocation2 + $0x4] sm:$0xf] %vm515, %v686
    %689 = vst.msk [vmem:[#allocation2 + $0x14] sm:$0xf] %vm515, %v687
    %v690 = vpack.c.bf16 %v684, %v682
    %v692 = vsel %vm165, %v690, 0
    %694 = vmatpush.bf16.msra.mxu0 0
    %695 = vmatpush.bf16.msra.mxu0 0
    %696 = vmatpush.bf16.msra.mxu0 0
    %697 = vmatpush.bf16.msra.mxu0 0
    %698 = vmatpush.bf16.msra.mxu0 0
    %699 = vmatpush.bf16.msra.mxu0 0
    %700 = vmatpush.bf16.msra.mxu0 %v329
    %701 = vmatpush.bf16.msra.mxu0 %v328
    %702 = vmatmul.bf16.gmra.mxu0 %v692
    %v703 = vpop.f32.mrf.mxu0
    %v704 = vadd.f32 0.0, %v703
    %v705 = vpop.f32.mrf.mxu0
    %v706 = vadd.f32 0.0, %v705
    %707 = vdwg.mxu0
    %v708 = vpack.c.bf16 %v704, %v704
    %v709 = vpack.c.bf16 %v706, %v706
    %v711 = vunpack.c.l.b16 %v708
    %v712 = vpack.c.b16 %v711, %v711
    %713 = vrot.lane.b32.xlu0 %v712, 120
    %v714 = vpop.permute.xlu0 %713
    %v716 = vsel %vm356, %v708, 0
    %v719 = vsel %vm356, %v714, 0
    %721 = vmatpush.bf16.xpose.msra.mxu0 0
    %722 = vmatpush.bf16.xpose.msra.mxu0 0
    %723 = vmatpush.bf16.xpose.msra.mxu0 0
    %724 = vmatpush.bf16.xpose.msra.mxu0 0
    %725 = vmatpush.bf16.xpose.msra.mxu0 0
    %726 = vmatpush.bf16.xpose.msra.mxu0 0
    %727 = vmatpush.bf16.xpose.msra.mxu0 0
    %728 = vmatpush.bf16.xpose.msra.mxu0 %v719
    %729 = vmatmul.bf16.gmra.mxu0 %v716
    %v730 = vpop.f32.mrf.mxu0
    %v731 = vadd.f32 0.0, %v730
    %v732 = vpop.f32.mrf.mxu0
    %733 = vdwg.mxu0
    %v735 = vunpack.c.l.b16 %v709
    %v736 = vpack.c.b16 %v735, %v735
    %737 = vrot.lane.b32.xlu0 %v736, 120
    %v738 = vpop.permute.xlu0 %737
    %v740 = vsel %vm356, %v709, 0
    %v743 = vsel %vm356, %v738, 0
    %745 = vmatpush.bf16.xpose.msra.mxu0 0
    %746 = vmatpush.bf16.xpose.msra.mxu0 0
    %747 = vmatpush.bf16.xpose.msra.mxu0 0
    %748 = vmatpush.bf16.xpose.msra.mxu0 0
    %749 = vmatpush.bf16.xpose.msra.mxu0 0
    %750 = vmatpush.bf16.xpose.msra.mxu0 0
    %751 = vmatpush.bf16.xpose.msra.mxu0 0
    %752 = vmatpush.bf16.xpose.msra.mxu0 %v743
    %753 = vmatmul.bf16.gmra.mxu0 %v740
    %v754 = vpop.f32.mrf.mxu0
    %v755 = vadd.f32 0.0, %v754
    %v756 = vpop.f32.mrf.mxu0
    %757 = vdwg.mxu0
    %v758 = vsel %vm356, %v731, -inf
    %v759 = vrot.slane %v758, 4
    %v760 = vmax.f32 %v758, %v759
    %v761 = vrot.slane %v760, 2
    %v762 = vmax.f32 %v760, %v761
    %v763 = vrot.slane %v762, 1
    %v764 = vmax.f32 %v762, %v763
    %v765 = vsel %vm356, %v755, -inf
    %v766 = vrot.slane %v765, 4
    %v767 = vmax.f32 %v765, %v766
    %v768 = vrot.slane %v767, 2
    %v769 = vmax.f32 %v767, %v768
    %v770 = vrot.slane %v769, 1
    %v771 = vmax.f32 %v769, %v770
    %v772 = vsub.f32 %v731, %v764
    %v773 = vsub.f32 %v755, %v771
    %v774 = vmul.f32 %v772, 1.442695
    %v775 = vpow.pop %v774
    %v776 = vmul.f32 %v773, 1.442695
    %v777 = vpow.pop %v776
    %v778 = vsel %vm356, %v775, 0.0
    %v779 = vrot.slane %v778, 4
    %v780 = vadd.f32 %v778, %v779
    %v781 = vrot.slane %v780, 2
    %v782 = vadd.f32 %v780, %v781
    %v783 = vrot.slane %v782, 1
    %v784 = vadd.f32 %v782, %v783
    %v785 = vsel %vm356, %v777, 0.0
    %v786 = vrot.slane %v785, 4
    %v787 = vadd.f32 %v785, %v786
    %v788 = vrot.slane %v787, 2
    %v789 = vadd.f32 %v787, %v788
    %v790 = vrot.slane %v789, 1
    %v791 = vadd.f32 %v789, %v790
    %v792 = vrcp.pop %v784
    %v793 = vrcp.pop %v791
    %v794 = vmul.f32 %v775, %v792
    %v795 = vmul.f32 %v777, %v793
    %v796 = vpack.c.bf16 %v794, %v794
    %v797 = vpack.c.bf16 %v795, %v795
    %798 = vrot.lane.b32.xlu0 %v712, 112
    %v799 = vpop.permute.xlu0 %798
    %v801 = vsel %vm356, %v796, 0
    %v804 = vsel %vm445, %v799, 0
    %806 = vmatpush.bf16.msra.mxu0 0
    %807 = vmatpush.bf16.msra.mxu0 0
    %808 = vmatpush.bf16.msra.mxu0 0
    %809 = vmatpush.bf16.msra.mxu0 0
    %810 = vmatpush.bf16.msra.mxu0 0
    %811 = vmatpush.bf16.msra.mxu0 0
    %812 = vmatpush.bf16.msra.mxu0 0
    %813 = vmatpush.bf16.msra.mxu0 %v804
    %814 = vmatmul.bf16.gmra.mxu0 %v801
    %v815 = vpop.f32.mrf.mxu0
    %v816 = vadd.f32 0.0, %v815
    %v817 = vpop.f32.mrf.mxu0
    %818 = vdwg.mxu0
    %819 = vrot.lane.b32.xlu0 %v736, 112
    %v820 = vpop.permute.xlu0 %819
    %v822 = vsel %vm356, %v797, 0
    %v825 = vsel %vm445, %v820, 0
    %827 = vmatpush.bf16.msra.mxu0 0
    %828 = vmatpush.bf16.msra.mxu0 0
    %829 = vmatpush.bf16.msra.mxu0 0
    %830 = vmatpush.bf16.msra.mxu0 0
    %831 = vmatpush.bf16.msra.mxu0 0
    %832 = vmatpush.bf16.msra.mxu0 0
    %833 = vmatpush.bf16.msra.mxu0 0
    %834 = vmatpush.bf16.msra.mxu0 %v825
    %835 = vmatmul.bf16.gmra.mxu0 %v822
    %v836 = vpop.f32.mrf.mxu0
    %v837 = vadd.f32 0.0, %v836
    %v838 = vpop.f32.mrf.mxu0
    %839 = vdwg.mxu0
    %v840 = vpack.c.bf16 %v837, %v816
    %v842 = vsel %vm165, %v840, 0
    %844 = vmatpush.bf16.msra.mxu0 0
    %845 = vmatpush.bf16.msra.mxu0 0
    %846 = vmatpush.bf16.msra.mxu0 0
    %847 = vmatpush.bf16.msra.mxu0 0
    %848 = vmatpush.bf16.msra.mxu0 0
    %849 = vmatpush.bf16.msra.mxu0 0
    %850 = vmatpush.bf16.msra.mxu0 %v493
    %851 = vmatpush.bf16.msra.mxu0 %v492
    %852 = vmatmul.bf16.gmra.mxu0 %v842
    %v853 = vpop.f32.mrf.mxu0
    %v854 = vadd.f32 0.0, %v853
    %v855 = vpop.f32.mrf.mxu0
    %v856 = vadd.f32 0.0, %v855
    %857 = vdwg.mxu0
    %v858 = vpack.c.bf16 %v854, %v854
    %v859 = vpack.c.bf16 %v856, %v856
    %860 = vst.msk [vmem:[#allocation2 + $0x8] sm:$0xf] %vm515, %v858
    %861 = vst.msk [vmem:[#allocation2 + $0x18] sm:$0xf] %vm515, %v859
    %v862 = vpack.c.bf16 %v856, %v854
    %v864 = vsel %vm165, %v862, 0
    %866 = vmatpush.bf16.msra.mxu0 0
    %867 = vmatpush.bf16.msra.mxu0 0
    %868 = vmatpush.bf16.msra.mxu0 0
    %869 = vmatpush.bf16.msra.mxu0 0
    %870 = vmatpush.bf16.msra.mxu0 0
    %871 = vmatpush.bf16.msra.mxu0 0
    %872 = vmatpush.bf16.msra.mxu0 %v329
    %873 = vmatpush.bf16.msra.mxu0 %v328
    %874 = vmatmul.bf16.gmra.mxu0 %v864
    %v875 = vpop.f32.mrf.mxu0
    %v876 = vadd.f32 0.0, %v875
    %v877 = vpop.f32.mrf.mxu0
    %v878 = vadd.f32 0.0, %v877
    %879 = vdwg.mxu0
    %v880 = vpack.c.bf16 %v876, %v876
    %v881 = vpack.c.bf16 %v878, %v878
    %v883 = vunpack.c.l.b16 %v880
    %v884 = vpack.c.b16 %v883, %v883
    %885 = vrot.lane.b32.xlu0 %v884, 120
    %v886 = vpop.permute.xlu0 %885
    %v888 = vsel %vm356, %v880, 0
    %v891 = vsel %vm356, %v886, 0
    %893 = vmatpush.bf16.xpose.msra.mxu0 0
    %894 = vmatpush.bf16.xpose.msra.mxu0 0
    %895 = vmatpush.bf16.xpose.msra.mxu0 0
    %896 = vmatpush.bf16.xpose.msra.mxu0 0
    %897 = vmatpush.bf16.xpose.msra.mxu0 0
    %898 = vmatpush.bf16.xpose.msra.mxu0 0
    %899 = vmatpush.bf16.xpose.msra.mxu0 0
    %900 = vmatpush.bf16.xpose.msra.mxu0 %v891
    %901 = vmatmul.bf16.gmra.mxu0 %v888
    %v902 = vpop.f32.mrf.mxu0
    %v903 = vadd.f32 0.0, %v902
    %v904 = vpop.f32.mrf.mxu0
    %905 = vdwg.mxu0
    %v907 = vunpack.c.l.b16 %v881
    %v908 = vpack.c.b16 %v907, %v907
    %909 = vrot.lane.b32.xlu0 %v908, 120
    %v910 = vpop.permute.xlu0 %909
    %v912 = vsel %vm356, %v881, 0
    %v915 = vsel %vm356, %v910, 0
    %917 = vmatpush.bf16.xpose.msra.mxu0 0
    %918 = vmatpush.bf16.xpose.msra.mxu0 0
    %919 = vmatpush.bf16.xpose.msra.mxu0 0
    %920 = vmatpush.bf16.xpose.msra.mxu0 0
    %921 = vmatpush.bf16.xpose.msra.mxu0 0
    %922 = vmatpush.bf16.xpose.msra.mxu0 0
    %923 = vmatpush.bf16.xpose.msra.mxu0 0
    %924 = vmatpush.bf16.xpose.msra.mxu0 %v915
    %925 = vmatmul.bf16.gmra.mxu0 %v912
    %v926 = vpop.f32.mrf.mxu0
    %v927 = vadd.f32 0.0, %v926
    %v928 = vpop.f32.mrf.mxu0
    %929 = vdwg.mxu0
    %v930 = vsel %vm356, %v903, -inf
    %v931 = vrot.slane %v930, 4
    %v932 = vmax.f32 %v930, %v931
    %v933 = vrot.slane %v932, 2
    %v934 = vmax.f32 %v932, %v933
    %v935 = vrot.slane %v934, 1
    %v936 = vmax.f32 %v934, %v935
    %v937 = vsel %vm356, %v927, -inf
    %v938 = vrot.slane %v937, 4
    %v939 = vmax.f32 %v937, %v938
    %v940 = vrot.slane %v939, 2
    %v941 = vmax.f32 %v939, %v940
    %v942 = vrot.slane %v941, 1
    %v943 = vmax.f32 %v941, %v942
    %v944 = vsub.f32 %v903, %v936
    %v945 = vsub.f32 %v927, %v943
    %v946 = vmul.f32 %v944, 1.442695
    %v947 = vpow.pop %v946
    %v948 = vmul.f32 %v945, 1.442695
    %v949 = vpow.pop %v948
    %v950 = vsel %vm356, %v947, 0.0
    %v951 = vrot.slane %v950, 4
    %v952 = vadd.f32 %v950, %v951
    %v953 = vrot.slane %v952, 2
    %v954 = vadd.f32 %v952, %v953
    %v955 = vrot.slane %v954, 1
    %v956 = vadd.f32 %v954, %v955
    %v957 = vsel %vm356, %v949, 0.0
    %v958 = vrot.slane %v957, 4
    %v959 = vadd.f32 %v957, %v958
    %v960 = vrot.slane %v959, 2
    %v961 = vadd.f32 %v959, %v960
    %v962 = vrot.slane %v961, 1
    %v963 = vadd.f32 %v961, %v962
    %v964 = vrcp.pop %v956
    %v965 = vrcp.pop %v963
    %v966 = vmul.f32 %v947, %v964
    %v967 = vmul.f32 %v949, %v965
    %v968 = vpack.c.bf16 %v966, %v966
    %v969 = vpack.c.bf16 %v967, %v967
    %970 = vrot.lane.b32.xlu0 %v884, 112
    %v971 = vpop.permute.xlu0 %970
    %v973 = vsel %vm356, %v968, 0
    %v976 = vsel %vm445, %v971, 0
    %978 = vmatpush.bf16.msra.mxu0 0
    %979 = vmatpush.bf16.msra.mxu0 0
    %980 = vmatpush.bf16.msra.mxu0 0
    %981 = vmatpush.bf16.msra.mxu0 0
    %982 = vmatpush.bf16.msra.mxu0 0
    %983 = vmatpush.bf16.msra.mxu0 0
    %984 = vmatpush.bf16.msra.mxu0 0
    %985 = vmatpush.bf16.msra.mxu0 %v976
    %986 = vmatmul.bf16.gmra.mxu0 %v973
    %v987 = vpop.f32.mrf.mxu0
    %v988 = vadd.f32 0.0, %v987
    %v989 = vpop.f32.mrf.mxu0
    %990 = vdwg.mxu0
    %991 = vrot.lane.b32.xlu0 %v908, 112
    %v992 = vpop.permute.xlu0 %991
    %v994 = vsel %vm356, %v969, 0
    %v997 = vsel %vm445, %v992, 0
    %999 = vmatpush.bf16.msra.mxu0 0
    %1000 = vmatpush.bf16.msra.mxu0 0
    %1001 = vmatpush.bf16.msra.mxu0 0
    %1002 = vmatpush.bf16.msra.mxu0 0
    %1003 = vmatpush.bf16.msra.mxu0 0
    %1004 = vmatpush.bf16.msra.mxu0 0
    %1005 = vmatpush.bf16.msra.mxu0 0
    %1006 = vmatpush.bf16.msra.mxu0 %v997
    %1007 = vmatmul.bf16.gmra.mxu0 %v994
    %v1008 = vpop.f32.mrf.mxu0
    %v1009 = vadd.f32 0.0, %v1008
    %v1010 = vpop.f32.mrf.mxu0
    %1011 = vdwg.mxu0
    %v1012 = vpack.c.bf16 %v1009, %v988
    %v1014 = vsel %vm165, %v1012, 0
    %1016 = vmatpush.bf16.msra.mxu0 0
    %1017 = vmatpush.bf16.msra.mxu0 0
    %1018 = vmatpush.bf16.msra.mxu0 0
    %1019 = vmatpush.bf16.msra.mxu0 0
    %1020 = vmatpush.bf16.msra.mxu0 0
    %1021 = vmatpush.bf16.msra.mxu0 0
    %1022 = vmatpush.bf16.msra.mxu0 %v493
    %1023 = vmatpush.bf16.msra.mxu0 %v492
    %1024 = vmatmul.bf16.gmra.mxu0 %v1014
    %v1025 = vpop.f32.mrf.mxu0
    %v1026 = vadd.f32 0.0, %v1025
    %v1027 = vpop.f32.mrf.mxu0
    %v1028 = vadd.f32 0.0, %v1027
    %1029 = vdwg.mxu0
    %v1030 = vpack.c.bf16 %v1026, %v1026
    %v1031 = vpack.c.bf16 %v1028, %v1028
    %1032 = vst.msk [vmem:[#allocation2 + $0xc] sm:$0xf] %vm515, %v1030
    %1033 = vst.msk [vmem:[#allocation2 + $0x1c] sm:$0xf] %vm515, %v1031
    %v1034 = vld [vmem:[#allocation2] sm:$0xf]
    %v1035 = vld [vmem:[#allocation2 + $0x4] sm:$0xf]
    %v1036 = vld [vmem:[#allocation2 + $0x8] sm:$0xf]
    %v1037 = vld [vmem:[#allocation2 + $0xc] sm:$0xf]
    %v1038 = vld [vmem:[#allocation2 + $0x10] sm:$0xf]
    %v1039 = vld [vmem:[#allocation2 + $0x14] sm:$0xf]
    %v1040 = vld [vmem:[#allocation2 + $0x18] sm:$0xf]
    %v1041 = vld [vmem:[#allocation2 + $0x1c] sm:$0xf]
    %v1042 = vld [vmem:[#allocation12] sm:$0xf]
    %v1043 = vld [vmem:[#allocation12 + $0x4] sm:$0xf]
    %v1044 = vld [vmem:[#allocation12 + $0x8] sm:$0xf]
    %v1045 = vld [vmem:[#allocation12 + $0xc] sm:$0xf]
    %v1054 = vunpack.c.l.b16 %v1034
    %v1055 = vunpack.c.l.b16 %v1035
    %v1056 = vunpack.c.l.b16 %v1036
    %v1057 = vunpack.c.l.b16 %v1037
    %v1058 = vunpack.c.l.b16 %v1038
    %v1059 = vunpack.c.l.b16 %v1039
    %v1060 = vunpack.c.l.b16 %v1040
    %v1061 = vunpack.c.l.b16 %v1041
    %v1062 = vpack.c.b16 %v1055, %v1054
    %v1063 = vpack.c.b16 %v1057, %v1056
    %v1064 = vpack.c.b16 %v1059, %v1058
    %v1065 = vpack.c.b16 %v1061, %v1060
    %v1070 = vunpack.c.l.b16 %v1042
    %v1071 = vunpack.c.l.b16 %v1043
    %v1072 = vunpack.c.l.b16 %v1044
    %v1073 = vunpack.c.l.b16 %v1045
    %v1074 = vpack.c.b16 %v1071, %v1070
    %v1075 = vpack.c.b16 %v1073, %v1072
    %v1079 = vsel %vm165, %v1062, 0
    %v1082 = vsel %vm165, %v1063, 0
    %v1085 = vsel %vm165, %v1064, 0
    %v1088 = vsel %vm165, %v1065, 0
    %1090 = vmatpush.bf16.msra.mxu0 0
    %1091 = vmatpush.bf16.msra.mxu0 0
    %1092 = vmatpush.bf16.msra.mxu0 0
    %1093 = vmatpush.bf16.msra.mxu0 0
    %1094 = vmatpush.bf16.msra.mxu0 0
    %1095 = vmatpush.bf16.msra.mxu0 0
    %1096 = vmatpush.bf16.msra.mxu0 %v1075
    %1097 = vmatpush.bf16.msra.mxu0 %v1074
    %1098 = vmatmul.bf16.gmra.mxu0 %v1079
    %v1099 = vpop.f32.mrf.mxu0
    %v1100 = vadd.f32 0.0, %v1099
    %v1101 = vpop.f32.mrf.mxu0
    %v1102 = vadd.f32 0.0, %v1101
    %1103 = vmatmul.bf16.gmra.mxu0 %v1082
    %v1104 = vpop.f32.mrf.mxu0
    %v1105 = vadd.f32 0.0, %v1104
    %v1106 = vpop.f32.mrf.mxu0
    %v1107 = vadd.f32 0.0, %v1106
    %1108 = vmatmul.bf16.gmra.mxu0 %v1085
    %v1109 = vpop.f32.mrf.mxu0
    %v1110 = vadd.f32 0.0, %v1109
    %v1111 = vpop.f32.mrf.mxu0
    %v1112 = vadd.f32 0.0, %v1111
    %1113 = vmatmul.bf16.gmra.mxu0 %v1088
    %v1114 = vpop.f32.mrf.mxu0
    %v1115 = vadd.f32 0.0, %v1114
    %v1116 = vpop.f32.mrf.mxu0
    %v1117 = vadd.f32 0.0, %v1116
    %1118 = vdwg.mxu0
    %v1119 = vsel %vm165, %v1100, 0.0
    %1120 = vadd.xlane.f32.xlu0 %v1119
    %v1121 = vpop.xlane.xlu0 %1120
    %v1122 = vsel %vm165, %v1102, 0.0
    %1123 = vadd.xlane.f32.xlu0 %v1122
    %v1124 = vpop.xlane.xlu0 %1123
    %v1125 = vsel %vm165, %v1105, 0.0
    %1126 = vadd.xlane.f32.xlu0 %v1125
    %v1127 = vpop.xlane.xlu0 %1126
    %v1128 = vsel %vm165, %v1107, 0.0
    %1129 = vadd.xlane.f32.xlu0 %v1128
    %v1130 = vpop.xlane.xlu0 %1129
    %v1131 = vsel %vm165, %v1110, 0.0
    %1132 = vadd.xlane.f32.xlu0 %v1131
    %v1133 = vpop.xlane.xlu0 %1132
    %v1134 = vsel %vm165, %v1112, 0.0
    %1135 = vadd.xlane.f32.xlu0 %v1134
    %v1136 = vpop.xlane.xlu0 %1135
    %v1137 = vsel %vm165, %v1115, 0.0
    %1138 = vadd.xlane.f32.xlu0 %v1137
    %v1139 = vpop.xlane.xlu0 %1138
    %v1140 = vsel %vm165, %v1117, 0.0
    %1141 = vadd.xlane.f32.xlu0 %v1140
    %v1142 = vpop.xlane.xlu0 %1141
    %v1143 = vmul.f32 %v1121, %v178
    %v1144 = vmul.f32 %v1124, %v178
    %v1145 = vmul.f32 %v1127, %v178
    %v1146 = vmul.f32 %v1130, %v178
    %v1147 = vmul.f32 %v1133, %v178
    %v1148 = vmul.f32 %v1136, %v178
    %v1149 = vmul.f32 %v1139, %v178
    %v1150 = vmul.f32 %v1142, %v178
    %v1151 = vsub.f32 %v1100, %v1143
    %v1152 = vsub.f32 %v1102, %v1144
    %v1153 = vsub.f32 %v1105, %v1145
    %v1154 = vsub.f32 %v1107, %v1146
    %v1155 = vsub.f32 %v1110, %v1147
    %v1156 = vsub.f32 %v1112, %v1148
    %v1157 = vsub.f32 %v1115, %v1149
    %v1158 = vsub.f32 %v1117, %v1150
    %v1159 = vmul.f32 %v1151, %v1151
    %v1160 = vmul.f32 %v1152, %v1152
    %v1161 = vmul.f32 %v1153, %v1153
    %v1162 = vmul.f32 %v1154, %v1154
    %v1163 = vmul.f32 %v1155, %v1155
    %v1164 = vmul.f32 %v1156, %v1156
    %v1165 = vmul.f32 %v1157, %v1157
    %v1166 = vmul.f32 %v1158, %v1158
    %v1167 = vsel %vm165, %v1159, 0.0
    %1168 = vadd.xlane.f32.xlu0 %v1167
    %v1169 = vpop.xlane.xlu0 %1168
    %v1170 = vsel %vm165, %v1160, 0.0
    %1171 = vadd.xlane.f32.xlu0 %v1170
    %v1172 = vpop.xlane.xlu0 %1171
    %v1173 = vsel %vm165, %v1161, 0.0
    %1174 = vadd.xlane.f32.xlu0 %v1173
    %v1175 = vpop.xlane.xlu0 %1174
    %v1176 = vsel %vm165, %v1162, 0.0
    %1177 = vadd.xlane.f32.xlu0 %v1176
    %v1178 = vpop.xlane.xlu0 %1177
    %v1179 = vsel %vm165, %v1163, 0.0
    %1180 = vadd.xlane.f32.xlu0 %v1179
    %v1181 = vpop.xlane.xlu0 %1180
    %v1182 = vsel %vm165, %v1164, 0.0
    %1183 = vadd.xlane.f32.xlu0 %v1182
    %v1184 = vpop.xlane.xlu0 %1183
    %v1185 = vsel %vm165, %v1165, 0.0
    %1186 = vadd.xlane.f32.xlu0 %v1185
    %v1187 = vpop.xlane.xlu0 %1186
    %v1188 = vsel %vm165, %v1166, 0.0
    %1189 = vadd.xlane.f32.xlu0 %v1188
    %v1190 = vpop.xlane.xlu0 %1189
    %v1191 = vmul.f32 %v1169, %v178
    %v1192 = vmul.f32 %v1172, %v178
    %v1193 = vmul.f32 %v1175, %v178
    %v1194 = vmul.f32 %v1178, %v178
    %v1195 = vmul.f32 %v1181, %v178
    %v1196 = vmul.f32 %v1184, %v178
    %v1197 = vmul.f32 %v1187, %v178
    %v1198 = vmul.f32 %v1190, %v178
    %v1199 = vadd.f32 %v1191, 1e-05
    %v1200 = vadd.f32 %v1192, 1e-05
    %v1201 = vadd.f32 %v1193, 1e-05
    %v1202 = vadd.f32 %v1194, 1e-05
    %v1203 = vadd.f32 %v1195, 1e-05
    %v1204 = vadd.f32 %v1196, 1e-05
    %v1205 = vadd.f32 %v1197, 1e-05
    %v1206 = vadd.f32 %v1198, 1e-05
    %v1207 = vrsqrt.pop %v1199
    %v1208 = vmul.f32 %v1207, %v1199
    %v1209 = vmul.f32 %v1208, %v1207
    %v1210 = vmul.f32 0.5, %v1209
    %v1211 = vsub.f32 1.5, %v1210
    %v1212 = vmul.f32 %v1207, %v1211
    %vm1213 = vweird.f32 %v1199
    %vm1214 = vweird.f32 %v1207
    %vm1215 = vmor %vm1213, %vm1214
    %v1216 = vsel %vm1215, %v1207, %v1212
    %v1217 = vrsqrt.pop %v1200
    %v1218 = vmul.f32 %v1217, %v1200
    %v1219 = vmul.f32 %v1218, %v1217
    %v1220 = vmul.f32 0.5, %v1219
    %v1221 = vsub.f32 1.5, %v1220
    %v1222 = vmul.f32 %v1217, %v1221
    %vm1223 = vweird.f32 %v1200
    %vm1224 = vweird.f32 %v1217
    %vm1225 = vmor %vm1223, %vm1224
    %v1226 = vsel %vm1225, %v1217, %v1222
    %v1227 = vrsqrt.pop %v1201
    %v1228 = vmul.f32 %v1227, %v1201
    %v1229 = vmul.f32 %v1228, %v1227
    %v1230 = vmul.f32 0.5, %v1229
    %v1231 = vsub.f32 1.5, %v1230
    %v1232 = vmul.f32 %v1227, %v1231
    %vm1233 = vweird.f32 %v1201
    %vm1234 = vweird.f32 %v1227
    %vm1235 = vmor %vm1233, %vm1234
    %v1236 = vsel %vm1235, %v1227, %v1232
    %v1237 = vrsqrt.pop %v1202
    %v1238 = vmul.f32 %v1237, %v1202
    %v1239 = vmul.f32 %v1238, %v1237
    %v1240 = vmul.f32 0.5, %v1239
    %v1241 = vsub.f32 1.5, %v1240
    %v1242 = vmul.f32 %v1237, %v1241
    %vm1243 = vweird.f32 %v1202
    %vm1244 = vweird.f32 %v1237
    %vm1245 = vmor %vm1243, %vm1244
    %v1246 = vsel %vm1245, %v1237, %v1242
    %v1247 = vrsqrt.pop %v1203
    %v1248 = vmul.f32 %v1247, %v1203
    %v1249 = vmul.f32 %v1248, %v1247
    %v1250 = vmul.f32 0.5, %v1249
    %v1251 = vsub.f32 1.5, %v1250
    %v1252 = vmul.f32 %v1247, %v1251
    %vm1253 = vweird.f32 %v1203
    %vm1254 = vweird.f32 %v1247
    %vm1255 = vmor %vm1253, %vm1254
    %v1256 = vsel %vm1255, %v1247, %v1252
    %v1257 = vrsqrt.pop %v1204
    %v1258 = vmul.f32 %v1257, %v1204
    %v1259 = vmul.f32 %v1258, %v1257
    %v1260 = vmul.f32 0.5, %v1259
    %v1261 = vsub.f32 1.5, %v1260
    %v1262 = vmul.f32 %v1257, %v1261
    %vm1263 = vweird.f32 %v1204
    %vm1264 = vweird.f32 %v1257
    %vm1265 = vmor %vm1263, %vm1264
    %v1266 = vsel %vm1265, %v1257, %v1262
    %v1267 = vrsqrt.pop %v1205
    %v1268 = vmul.f32 %v1267, %v1205
    %v1269 = vmul.f32 %v1268, %v1267
    %v1270 = vmul.f32 0.5, %v1269
    %v1271 = vsub.f32 1.5, %v1270
    %v1272 = vmul.f32 %v1267, %v1271
    %vm1273 = vweird.f32 %v1205
    %vm1274 = vweird.f32 %v1267
    %vm1275 = vmor %vm1273, %vm1274
    %v1276 = vsel %vm1275, %v1267, %v1272
    %v1277 = vrsqrt.pop %v1206
    %v1278 = vmul.f32 %v1277, %v1206
    %v1279 = vmul.f32 %v1278, %v1277
    %v1280 = vmul.f32 0.5, %v1279
    %v1281 = vsub.f32 1.5, %v1280
    %v1282 = vmul.f32 %v1277, %v1281
    %vm1283 = vweird.f32 %v1206
    %vm1284 = vweird.f32 %v1277
    %vm1285 = vmor %vm1283, %vm1284
    %v1286 = vsel %vm1285, %v1277, %v1282
    %v1287 = vmul.f32 %v1151, %v1216
    %v1288 = vmul.f32 %v1152, %v1226
    %v1289 = vmul.f32 %v1153, %v1236
    %v1290 = vmul.f32 %v1154, %v1246
    %v1291 = vmul.f32 %v1155, %v1256
    %v1292 = vmul.f32 %v1156, %v1266
    %v1293 = vmul.f32 %v1157, %v1276
    %v1294 = vmul.f32 %v1158, %v1286
    %v1295 = vperm.slane %v135, 4
    %v1296 = vmul.f32 %v1287, %v1295
    %v1297 = vmul.f32 %v1288, %v1295
    %v1298 = vmul.f32 %v1289, %v1295
    %v1299 = vmul.f32 %v1290, %v1295
    %v1300 = vmul.f32 %v1291, %v1295
    %v1301 = vmul.f32 %v1292, %v1295
    %v1302 = vmul.f32 %v1293, %v1295
    %v1303 = vmul.f32 %v1294, %v1295
    %v1304 = vperm.slane %v135, 5
    %v1305 = vadd.f32 %v1296, %v1304
    %v1306 = vadd.f32 %v1297, %v1304
    %v1307 = vadd.f32 %v1298, %v1304
    %v1308 = vadd.f32 %v1299, %v1304
    %v1309 = vadd.f32 %v1300, %v1304
    %v1310 = vadd.f32 %v1301, %v1304
    %v1311 = vadd.f32 %v1302, %v1304
    %v1312 = vadd.f32 %v1303, %v1304
    %v1313 = vmax.f32 %v1305, 0.0
    %v1314 = vmax.f32 %v1306, 0.0
    %v1315 = vmax.f32 %v1307, 0.0
    %v1316 = vmax.f32 %v1308, 0.0
    %v1317 = vmax.f32 %v1309, 0.0
    %v1318 = vmax.f32 %v1310, 0.0
    %v1319 = vmax.f32 %v1311, 0.0
    %v1320 = vmax.f32 %v1312, 0.0
    %1321 = vst.msk [vmem:[#allocation15] sm:$0xff] %vm165, %v1313
    %1322 = vst.msk [vmem:[#allocation15 + $0x8] sm:$0xff] %vm165, %v1314
    %1323 = vst.msk [vmem:[#allocation15 + $0x10] sm:$0xff] %vm165, %v1315
    %1324 = vst.msk [vmem:[#allocation15 + $0x18] sm:$0xff] %vm165, %v1316
    %1325 = vst.msk [vmem:[#allocation15 + $0x20] sm:$0xff] %vm165, %v1317
    %1326 = vst.msk [vmem:[#allocation15 + $0x28] sm:$0xff] %vm165, %v1318
    %1327 = vst.msk [vmem:[#allocation15 + $0x30] sm:$0xff] %vm165, %v1319
    %1328 = vst.msk [vmem:[#allocation15 + $0x38] sm:$0xff] %vm165, %v1320
    // Predicated region
    $region58: #{point_encoder.1} parent=1 // pred_check
      _
    $region59: #{point_encoder.1} parent=1 // pred_check_branch
      %1330 = sbr.rel (0) target = $region61
    $region60: #{point_encoder.1} parent=1 // pred_region
      %1332 = vsyncadd [#allocation5], 0
      %s1333 = sshll.u32 [#allocation15], 4
      %s1334 = int_to_ptr.vmem [resolvable:$true] %s1333
      %s1335 = sshll.u32 %s7, 4
      %s1336 = int_to_ptr.hbm [resolvable:$true] %s1335
      %1341 = dma.vmem_to_hbm [thread:$0]  %s1334, 1024, %s1336, [#allocation5], 128, 128, 8
    $region61: #{point_encoder.1} parent=1 // pred_fallthru
      _
    // Predicated region
    $region62: #{point_encoder.1} parent=1 // pred_check
      _
    $region63: #{point_encoder.1} parent=1 // pred_check_branch
      %1343 = sbr.rel (0) target = $region65
    $region64: #{point_encoder.1} parent=1 // pred_region
      %1345 = dma.done [#allocation5], 1024
    $region65: #{point_encoder.1} parent=1 // pred_fallthru
      _
    %1346 = vsyncpa [#allocation4], 1
    %1347 = vsyncpa [#allocation7], 1
    %1348 = vsyncpa [#allocation10], 1
    %1349 = vsyncpa [#allocation13], 1
    %1350 = vsyncpa [#allocation5], 1

</llo_original>
